<compile_context>
chip_gen: v7x
topology: tpu7x:2x2x1
jax: 0.10.0
libtpu: 0.0.40
codegen_flags: <defaults>
</compile_context>

<pallas_src>
import math

import jax
import jax.numpy as jnp
from jax.experimental import pallas as pl
from jax.experimental.pallas import tpu as pltpu  # noqa: F401  (kept for TPU-specific tuning hooks)

# --- model hyper-parameters (small, consistent with the module) ---
BATCH = 2
TOKENS = 8
EMBED_DIM = 32
NUM_HEADS = 4
HEAD_DIM = EMBED_DIM // NUM_HEADS
MLP_HIDDEN = 64
LN_EPS = 1e-5

HI = jax.lax.Precision.HIGHEST  # for wrapper-side weight folding and the pure-JAX reference


def _layernorm(x, gamma, beta):
    # PyTorch nn.LayerNorm semantics: biased variance over last dim, eps inside rsqrt.
    mean = jnp.mean(x, axis=-1, keepdims=True)
    var = jnp.mean((x - mean) ** 2, axis=-1, keepdims=True)
    return (x - mean) * jax.lax.rsqrt(var + LN_EPS) * gamma + beta


def _gelu_exact(x):
    # nn.GELU() default (approximate='none'): 0.5*x*(1+erf(x/sqrt(2)))
    return 0.5 * x * (1.0 + jax.lax.erf(x * (1.0 / math.sqrt(2.0))))


def encoder_block_kernel(x_ref,          # (B*T, D)
                         vec_ref,        # (8, 128) packed LN/bias vectors
                         w_attn_ref,     # (D, H*D + 2D) = [Wv'_heads | Wq(scaled) | Wk]
                         w1_ref,         # (D, MLP_HIDDEN)
                         w2_ref,         # (MLP_HIDDEN, D)
                         out_ref):       # (B*T, D)
    N, D = x_ref.shape                   # (16, 32)
    B = BATCH
    T = N // B
    H = NUM_HEADS
    HD = D // H

    x = x_ref[...]                                               # (N, D)

    # ---- unpack the small-vector slab (single operand, row/lane slices are free) ----
    vecs = vec_ref[...]                                          # (8, 128)
    ln1_g = vecs[0:1, 0:D]
    ln1_b = vecs[1:2, 0:D]
    bproj = vecs[2:3, 0:D]
    ln2_g = vecs[3:4, 0:D]
    ln2_b = vecs[4:5, 0:D]
    b1 = vecs[5:6, 0:MLP_HIDDEN]
    b2 = vecs[6:7, 0:D]

    # ---- LayerNorm 1 (f32 elementwise) ----
    x_ln1 = _layernorm(x, ln1_g, ln1_b)                          # (N, D)

    # ---- Attention projections: ONE wide MXU dot ----
    # slab = [V'_0 | ... | V'_{H-1} | Q | K], where V'_h = x_ln1 @ (Wv_h @ Wproj_h) is the
    # per-head value already multiplied by its slice of the output projection, and 1/sqrt(hd)
    # is folded into Wq.
    slab = jnp.dot(x_ln1, w_attn_ref[...],
                   preferred_element_type=jnp.float32)           # (N, H*D + 2D) = (16, 192)
    vp_slab = slab[:, 0:H * D]                                   # (N, 128)
    q_slab = slab[:, H * D:H * D + D]                            # (N, 32)
    k_slab = slab[:, H * D + D:H * D + 2 * D]                    # (N, 32)

    # ---- per-(batch, head) views: static slices + leading-dim stacks (no broadcasts) ----
    q_bh = jnp.stack([q_slab[b * T:(b + 1) * T, h * HD:(h + 1) * HD]
                      for b in range(B) for h in range(H)], axis=0)        # (B*H, T, hd)
    k_bh = jnp.stack([k_slab[b * T:(b + 1) * T, h * HD:(h + 1) * HD]
                      for b in range(B) for h in range(H)], axis=0)        # (B*H, T, hd)
    vp_bh = jnp.stack([vp_slab[b * T:(b + 1) * T, h * D:(h + 1) * D]
                       for b in range(B) for h in range(H)], axis=0)       # (B*H, T, D)

    # ---- Attention, batched over (batch, head); exact softmax divide ----
    s = jnp.einsum('zte,zse->zts', q_bh, k_bh,
                   preferred_element_type=jnp.float32)           # (B*H, T, T)
    m = jnp.max(s, axis=-1, keepdims=True)
    e = jnp.exp(s - m)
    attn = e / jnp.sum(e, axis=-1, keepdims=True)
    ctx = jnp.einsum('zts,zsd->ztd', attn, vp_bh,
                     preferred_element_type=jnp.float32)         # (B*H, T, D) already projected

    # ---- head merge: free leading-dim reshape + sum over heads, then bias ----
    attn_out = jnp.sum(ctx.reshape(B, H, T, D), axis=1).reshape(N, D) + bproj
    # TODO(synk): dropout (p=0.1) is identity here (inference mode); training-mode RNG dropout not implemented.

    x1 = x + attn_out                                            # residual 1

    # ---- LayerNorm 2 + MLP on the flattened (N, D) slab: one 2-D dot per layer ----
    x_ln2 = _layernorm(x1, ln2_g, ln2_b)
    h1 = jnp.dot(x_ln2, w1_ref[...], preferred_element_type=jnp.float32) + b1
    h1 = _gelu_exact(h1)
    mlp_out = jnp.dot(h1, w2_ref[...], preferred_element_type=jnp.float32) + b2

    out_ref[...] = (x1 + mlp_out).astype(out_ref.dtype)          # residual 2


def _pack_vectors(p):
    """Pack all tiny bias/LN vectors into one pre-padded (8, 128) f32 slab."""
    def row(v):
        v = v.reshape(1, -1).astype(jnp.float32)
        return jnp.pad(v, ((0, 0), (0, 128 - v.shape[1])))
    rows = [row(p["ln1_g"]), row(p["ln1_b"]), row(p["bproj"]),
            row(p["ln2_g"]), row(p["ln2_b"]), row(p["b1"]), row(p["b2"]),
            jnp.zeros((1, 128), jnp.float32)]
    return jnp.concatenate(rows, axis=0)                          # (8, 128)


@jax.jit
def transformer_encoder_block(x, params):
    B, T, D = x.shape
    H, HD = NUM_HEADS, HEAD_DIM
    scale = 1.0 / math.sqrt(HD)

    # Wrapper-side weight re-layout / folding (plain XLA, outside the kernel):
    wqkv = params["wqkv"]                                        # (D, 3D), columns = [q | k | v]
    wq = wqkv[:, 0:D] * scale                                    # fold 1/sqrt(hd) into W_q
    wk = wqkv[:, D:2 * D]
    wv = wqkv[:, 2 * D:3 * D]
    wproj = params["wproj"]                                      # (D, D)
    # Fold W_proj into W_v per head: Wv'_h = Wv_h @ Wproj_h  (D, D) each.
    wvp = jnp.concatenate(
        [jnp.dot(wv[:, h * HD:(h + 1) * HD], wproj[h * HD:(h + 1) * HD, :], precision=HI)
         for h in range(H)], axis=1)                             # (D, H*D)
    w_attn = jnp.concatenate([wvp, wq, wk], axis=1)              # (D, H*D + 2D) = (32, 192)

    vec_pack = _pack_vectors(params)                             # (8, 128)
    x_flat = x.reshape(B * T, D)

    # Single invocation, no grid: every operand is a full-array block resident in VMEM.
    out_flat = pl.pallas_call(
        encoder_block_kernel,
        out_shape=jax.ShapeDtypeStruct((B * T, D), x.dtype),
    )(x_flat, vec_pack, w_attn, params["w1"], params["w2"])

    return out_flat.reshape(B, T, D)


def reference_block(x, p):
    """Pure-JAX reference of the PyTorch forward (eval mode), HIGHEST-precision matmuls."""
    def ln(v, g, b):
        mu = jnp.mean(v, axis=-1, keepdims=True)
        var = jnp.mean((v - mu) ** 2, axis=-1, keepdims=True)
        return (v - mu) / jnp.sqrt(var + LN_EPS) * g + b

    B, T, D = x.shape
    x_ln1 = ln(x, p["ln1_g"], p["ln1_b"])
    qkv = jnp.einsum('btd,de->bte', x_ln1, p["wqkv"], precision=HI)      # (B, T, 3D)
    qkv = qkv.reshape(B, T, 3, NUM_HEADS, HEAD_DIM).transpose(2, 0, 3, 1, 4)
    q, k, v = qkv[0], qkv[1], qkv[2]                                     # (B, H, T, hd)
    dots = jnp.einsum('bhte,bhse->bhts', q, k, precision=HI) / math.sqrt(HEAD_DIM)
    attn = jax.nn.softmax(dots, axis=-1)
    out = jnp.einsum('bhts,bhse->bhte', attn, v, precision=HI)
    out = out.transpose(0, 2, 1, 3).reshape(B, T, EMBED_DIM)
    attn_out = jnp.einsum('btd,de->bte', out, p["wproj"], precision=HI) + p["bproj"]
    x1 = x + attn_out
    x_ln2 = ln(x1, p["ln2_g"], p["ln2_b"])
    h = jax.nn.gelu(jnp.einsum('btd,dh->bth', x_ln2, p["w1"], precision=HI) + p["b1"],
                    approximate=False)
    mlp_out = jnp.einsum('bth,hd->btd', h, p["w2"], precision=HI) + p["b2"]
    return x1 + mlp_out


def init_params(key):
    ks = jax.random.split(key, 8)
    s = 0.02
    return {
        "ln1_g": jnp.ones((1, EMBED_DIM), jnp.float32),
        "ln1_b": jnp.zeros((1, EMBED_DIM), jnp.float32),
        "wqkv": s * jax.random.normal(ks[0], (EMBED_DIM, 3 * EMBED_DIM), jnp.float32),
        "wproj": s * jax.random.normal(ks[1], (EMBED_DIM, EMBED_DIM), jnp.float32),
        "bproj": s * jax.random.normal(ks[2], (1, EMBED_DIM), jnp.float32),
        "ln2_g": jnp.ones((1, EMBED_DIM), jnp.float32),
        "ln2_b": jnp.zeros((1, EMBED_DIM), jnp.float32),
        "w1": s * jax.random.normal(ks[3], (EMBED_DIM, MLP_HIDDEN), jnp.float32),
        "b1": s * jax.random.normal(ks[4], (1, MLP_HIDDEN), jnp.float32),
        "w2": s * jax.random.normal(ks[5], (MLP_HIDDEN, EMBED_DIM), jnp.float32),
        "b2": s * jax.random.normal(ks[6], (1, EMBED_DIM), jnp.float32),
    }


if __name__ == "__main__":
    key = jax.random.PRNGKey(0)
    k_x, k_p = jax.random.split(key)
    x = jax.random.normal(k_x, (BATCH, TOKENS, EMBED_DIM), jnp.float32)
    params = init_params(k_p)

    out = transformer_encoder_block(x, params)
    out = jax.block_until_ready(out)

    ref = reference_block(x, params)
    assert out.shape == (BATCH, TOKENS, EMBED_DIM)
    # Exact softmax divide + HIGHEST-precision reference restore tight f32 parity.
    assert jnp.allclose(out, ref, rtol=1e-5, atol=1e-5), "mismatch vs reference"
    print("KERNEL_OK")
</pallas_src>

<mosaic_0001>
module attributes {stable_mosaic.version = 11 : i64} {
  func.func @encoder_block_kernel(%arg0: memref<16x32xf32, #tpu.memory_space<vmem>>, %arg1: memref<8x128xf32, #tpu.memory_space<vmem>>, %arg2: memref<32x192xf32, #tpu.memory_space<vmem>>, %arg3: memref<32x64xf32, #tpu.memory_space<vmem>>, %arg4: memref<64x32xf32, #tpu.memory_space<vmem>>, %arg5: memref<16x32xf32, #tpu.memory_space<vmem>>) attributes {dimension_semantics = [], scalar_prefetch = 0 : i64, scratch_operands = 0 : i64, tpu.core_type = #tpu.core_type<tc>} {
    %c0 = arith.constant 0 : index
    %c0_0 = arith.constant 0 : index
    %0 = vector.load %arg0[%c0, %c0_0] : memref<16x32xf32, #tpu.memory_space<vmem>>, vector<16x32xf32>
    %c0_1 = arith.constant 0 : index
    %c0_2 = arith.constant 0 : index
    %1 = vector.load %arg1[%c0_1, %c0_2] : memref<8x128xf32, #tpu.memory_space<vmem>>, vector<8x128xf32>
    %2 = vector.extract_strided_slice %1 {offsets = [0, 0], sizes = [1, 32], strides = [1, 1]} : vector<8x128xf32> to vector<1x32xf32>
    %3 = vector.extract_strided_slice %1 {offsets = [1, 0], sizes = [1, 32], strides = [1, 1]} : vector<8x128xf32> to vector<1x32xf32>
    %4 = vector.extract_strided_slice %1 {offsets = [2, 0], sizes = [1, 32], strides = [1, 1]} : vector<8x128xf32> to vector<1x32xf32>
    %5 = vector.extract_strided_slice %1 {offsets = [3, 0], sizes = [1, 32], strides = [1, 1]} : vector<8x128xf32> to vector<1x32xf32>
    %6 = vector.extract_strided_slice %1 {offsets = [4, 0], sizes = [1, 32], strides = [1, 1]} : vector<8x128xf32> to vector<1x32xf32>
    %7 = vector.extract_strided_slice %1 {offsets = [5, 0], sizes = [1, 64], strides = [1, 1]} : vector<8x128xf32> to vector<1x64xf32>
    %8 = vector.extract_strided_slice %1 {offsets = [6, 0], sizes = [1, 32], strides = [1, 1]} : vector<8x128xf32> to vector<1x32xf32>
    %cst = arith.constant dense<0.000000e+00> : vector<16xf32>
    %9 = vector.multi_reduction <add>, %0, %cst [1] : vector<16x32xf32> to vector<16xf32>
    %10 = vector.shape_cast %9 : vector<16xf32> to vector<16x1xf32>
    %cst_3 = arith.constant 3.200000e+01 : f32
    %11 = vector.broadcast %cst_3 : f32 to vector<16x1xf32>
    %12 = arith.divf %10, %11 : vector<16x1xf32>
    %13 = vector.broadcast %12 : vector<16x1xf32> to vector<16x32xf32>
    %14 = arith.subf %0, %13 : vector<16x32xf32>
    %15 = arith.mulf %14, %14 : vector<16x32xf32>
    %cst_4 = arith.constant dense<0.000000e+00> : vector<16xf32>
    %16 = vector.multi_reduction <add>, %15, %cst_4 [1] : vector<16x32xf32> to vector<16xf32>
    %17 = vector.shape_cast %16 : vector<16xf32> to vector<16x1xf32>
    %cst_5 = arith.constant 3.200000e+01 : f32
    %18 = vector.broadcast %cst_5 : f32 to vector<16x1xf32>
    %19 = arith.divf %17, %18 : vector<16x1xf32>
    %20 = vector.broadcast %12 : vector<16x1xf32> to vector<16x32xf32>
    %21 = arith.subf %0, %20 : vector<16x32xf32>
    %cst_6 = arith.constant 9.99999974E-6 : f32
    %22 = vector.broadcast %cst_6 : f32 to vector<16x1xf32>
    %23 = arith.addf %19, %22 : vector<16x1xf32>
    %24 = math.rsqrt %23 : vector<16x1xf32>
    %25 = vector.broadcast %24 : vector<16x1xf32> to vector<16x32xf32>
    %26 = arith.mulf %21, %25 : vector<16x32xf32>
    %27 = vector.broadcast %2 : vector<1x32xf32> to vector<16x32xf32>
    %28 = arith.mulf %26, %27 : vector<16x32xf32>
    %29 = vector.broadcast %3 : vector<1x32xf32> to vector<16x32xf32>
    %30 = arith.addf %28, %29 : vector<16x32xf32>
    %c0_7 = arith.constant 0 : index
    %c0_8 = arith.constant 0 : index
    %31 = vector.load %arg2[%c0_7, %c0_8] : memref<32x192xf32, #tpu.memory_space<vmem>>, vector<32x192xf32>
    %cst_9 = arith.constant dense<0.000000e+00> : vector<16x192xf32>
    %32 = tpu.matmul %30, %31, %cst_9 {dimension_numbers = #tpu.dot_dimension_numbers<[1], [0], [0], [1], [0, 0, 1, 1], [], []>} : vector<16x32xf32>, vector<32x192xf32>, vector<16x192xf32> -> vector<16x192xf32>
    %33 = vector.extract_strided_slice %32 {offsets = [0, 0], sizes = [16, 128], strides = [1, 1]} : vector<16x192xf32> to vector<16x128xf32>
    %34 = vector.extract_strided_slice %32 {offsets = [0, 128], sizes = [16, 32], strides = [1, 1]} : vector<16x192xf32> to vector<16x32xf32>
    %35 = vector.extract_strided_slice %32 {offsets = [0, 160], sizes = [16, 32], strides = [1, 1]} : vector<16x192xf32> to vector<16x32xf32>
    %36 = vector.extract_strided_slice %34 {offsets = [0, 0], sizes = [8, 8], strides = [1, 1]} : vector<16x32xf32> to vector<8x8xf32>
    %37 = vector.extract_strided_slice %34 {offsets = [0, 8], sizes = [8, 8], strides = [1, 1]} : vector<16x32xf32> to vector<8x8xf32>
    %38 = vector.extract_strided_slice %34 {offsets = [0, 16], sizes = [8, 8], strides = [1, 1]} : vector<16x32xf32> to vector<8x8xf32>
    %39 = vector.extract_strided_slice %34 {offsets = [0, 24], sizes = [8, 8], strides = [1, 1]} : vector<16x32xf32> to vector<8x8xf32>
    %40 = vector.extract_strided_slice %34 {offsets = [8, 0], sizes = [8, 8], strides = [1, 1]} : vector<16x32xf32> to vector<8x8xf32>
    %41 = vector.extract_strided_slice %34 {offsets = [8, 8], sizes = [8, 8], strides = [1, 1]} : vector<16x32xf32> to vector<8x8xf32>
    %42 = vector.extract_strided_slice %34 {offsets = [8, 16], sizes = [8, 8], strides = [1, 1]} : vector<16x32xf32> to vector<8x8xf32>
    %43 = vector.extract_strided_slice %34 {offsets = [8, 24], sizes = [8, 8], strides = [1, 1]} : vector<16x32xf32> to vector<8x8xf32>
    %44 = vector.shape_cast %36 : vector<8x8xf32> to vector<1x8x8xf32>
    %45 = vector.shape_cast %37 : vector<8x8xf32> to vector<1x8x8xf32>
    %46 = vector.shape_cast %38 : vector<8x8xf32> to vector<1x8x8xf32>
    %47 = vector.shape_cast %39 : vector<8x8xf32> to vector<1x8x8xf32>
    %48 = vector.shape_cast %40 : vector<8x8xf32> to vector<1x8x8xf32>
    %49 = vector.shape_cast %41 : vector<8x8xf32> to vector<1x8x8xf32>
    %50 = vector.shape_cast %42 : vector<8x8xf32> to vector<1x8x8xf32>
    %51 = vector.shape_cast %43 : vector<8x8xf32> to vector<1x8x8xf32>
    %52 = tpu.concatenate %44, %45, %46, %47, %48, %49, %50, %51 in 0 : vector<1x8x8xf32>, vector<1x8x8xf32>, vector<1x8x8xf32>, vector<1x8x8xf32>, vector<1x8x8xf32>, vector<1x8x8xf32>, vector<1x8x8xf32>, vector<1x8x8xf32> -> vector<8x8x8xf32>
    %53 = vector.extract_strided_slice %35 {offsets = [0, 0], sizes = [8, 8], strides = [1, 1]} : vector<16x32xf32> to vector<8x8xf32>
    %54 = vector.extract_strided_slice %35 {offsets = [0, 8], sizes = [8, 8], strides = [1, 1]} : vector<16x32xf32> to vector<8x8xf32>
    %55 = vector.extract_strided_slice %35 {offsets = [0, 16], sizes = [8, 8], strides = [1, 1]} : vector<16x32xf32> to vector<8x8xf32>
    %56 = vector.extract_strided_slice %35 {offsets = [0, 24], sizes = [8, 8], strides = [1, 1]} : vector<16x32xf32> to vector<8x8xf32>
    %57 = vector.extract_strided_slice %35 {offsets = [8, 0], sizes = [8, 8], strides = [1, 1]} : vector<16x32xf32> to vector<8x8xf32>
    %58 = vector.extract_strided_slice %35 {offsets = [8, 8], sizes = [8, 8], strides = [1, 1]} : vector<16x32xf32> to vector<8x8xf32>
    %59 = vector.extract_strided_slice %35 {offsets = [8, 16], sizes = [8, 8], strides = [1, 1]} : vector<16x32xf32> to vector<8x8xf32>
    %60 = vector.extract_strided_slice %35 {offsets = [8, 24], sizes = [8, 8], strides = [1, 1]} : vector<16x32xf32> to vector<8x8xf32>
    %61 = vector.shape_cast %53 : vector<8x8xf32> to vector<1x8x8xf32>
    %62 = vector.shape_cast %54 : vector<8x8xf32> to vector<1x8x8xf32>
    %63 = vector.shape_cast %55 : vector<8x8xf32> to vector<1x8x8xf32>
    %64 = vector.shape_cast %56 : vector<8x8xf32> to vector<1x8x8xf32>
    %65 = vector.shape_cast %57 : vector<8x8xf32> to vector<1x8x8xf32>
    %66 = vector.shape_cast %58 : vector<8x8xf32> to vector<1x8x8xf32>
    %67 = vector.shape_cast %59 : vector<8x8xf32> to vector<1x8x8xf32>
    %68 = vector.shape_cast %60 : vector<8x8xf32> to vector<1x8x8xf32>
    %69 = tpu.concatenate %61, %62, %63, %64, %65, %66, %67, %68 in 0 : vector<1x8x8xf32>, vector<1x8x8xf32>, vector<1x8x8xf32>, vector<1x8x8xf32>, vector<1x8x8xf32>, vector<1x8x8xf32>, vector<1x8x8xf32>, vector<1x8x8xf32> -> vector<8x8x8xf32>
    %70 = vector.extract_strided_slice %33 {offsets = [0, 0], sizes = [8, 32], strides = [1, 1]} : vector<16x128xf32> to vector<8x32xf32>
    %71 = vector.extract_strided_slice %33 {offsets = [0, 32], sizes = [8, 32], strides = [1, 1]} : vector<16x128xf32> to vector<8x32xf32>
    %72 = vector.extract_strided_slice %33 {offsets = [0, 64], sizes = [8, 32], strides = [1, 1]} : vector<16x128xf32> to vector<8x32xf32>
    %73 = vector.extract_strided_slice %33 {offsets = [0, 96], sizes = [8, 32], strides = [1, 1]} : vector<16x128xf32> to vector<8x32xf32>
    %74 = vector.extract_strided_slice %33 {offsets = [8, 0], sizes = [8, 32], strides = [1, 1]} : vector<16x128xf32> to vector<8x32xf32>
    %75 = vector.extract_strided_slice %33 {offsets = [8, 32], sizes = [8, 32], strides = [1, 1]} : vector<16x128xf32> to vector<8x32xf32>
    %76 = vector.extract_strided_slice %33 {offsets = [8, 64], sizes = [8, 32], strides = [1, 1]} : vector<16x128xf32> to vector<8x32xf32>
    %77 = vector.extract_strided_slice %33 {offsets = [8, 96], sizes = [8, 32], strides = [1, 1]} : vector<16x128xf32> to vector<8x32xf32>
    %78 = vector.shape_cast %70 : vector<8x32xf32> to vector<1x8x32xf32>
    %79 = vector.shape_cast %71 : vector<8x32xf32> to vector<1x8x32xf32>
    %80 = vector.shape_cast %72 : vector<8x32xf32> to vector<1x8x32xf32>
    %81 = vector.shape_cast %73 : vector<8x32xf32> to vector<1x8x32xf32>
    %82 = vector.shape_cast %74 : vector<8x32xf32> to vector<1x8x32xf32>
    %83 = vector.shape_cast %75 : vector<8x32xf32> to vector<1x8x32xf32>
    %84 = vector.shape_cast %76 : vector<8x32xf32> to vector<1x8x32xf32>
    %85 = vector.shape_cast %77 : vector<8x32xf32> to vector<1x8x32xf32>
    %86 = tpu.concatenate %78, %79, %80, %81, %82, %83, %84, %85 in 0 : vector<1x8x32xf32>, vector<1x8x32xf32>, vector<1x8x32xf32>, vector<1x8x32xf32>, vector<1x8x32xf32>, vector<1x8x32xf32>, vector<1x8x32xf32>, vector<1x8x32xf32> -> vector<8x8x32xf32>
    "tpu.trace_start"() <{level = 10 : i32, message = "zte,zse->zts"}> : () -> ()
    %cst_10 = arith.constant dense<0.000000e+00> : vector<8x8x8xf32>
    %87 = tpu.matmul %52, %69, %cst_10 {dimension_numbers = #tpu.dot_dimension_numbers<[2], [2], [1], [1], [0, 0, 0, 1, 1, 1], [0], [0]>} : vector<8x8x8xf32>, vector<8x8x8xf32>, vector<8x8x8xf32> -> vector<8x8x8xf32>
    "tpu.trace_stop"() : () -> ()
    %cst_11 = arith.constant dense<0xFF800000> : vector<8x8xf32>
    %88 = vector.multi_reduction <maximumf>, %87, %cst_11 [2] : vector<8x8x8xf32> to vector<8x8xf32>
    %89 = vector.shape_cast %88 : vector<8x8xf32> to vector<8x8x1xf32>
    %90 = vector.broadcast %89 : vector<8x8x1xf32> to vector<8x8x8xf32>
    %91 = arith.subf %87, %90 : vector<8x8x8xf32>
    %92 = math.exp %91 : vector<8x8x8xf32>
    %cst_12 = arith.constant dense<0.000000e+00> : vector<8x8xf32>
    %93 = vector.multi_reduction <add>, %92, %cst_12 [2] : vector<8x8x8xf32> to vector<8x8xf32>
    %94 = vector.shape_cast %93 : vector<8x8xf32> to vector<8x8x1xf32>
    %95 = vector.broadcast %94 : vector<8x8x1xf32> to vector<8x8x8xf32>
    %96 = arith.divf %92, %95 : vector<8x8x8xf32>
    "tpu.trace_start"() <{level = 10 : i32, message = "zts,zsd->ztd"}> : () -> ()
    %cst_13 = arith.constant dense<0.000000e+00> : vector<8x8x32xf32>
    %97 = tpu.matmul %96, %86, %cst_13 {dimension_numbers = #tpu.dot_dimension_numbers<[2], [1], [1], [2], [0, 0, 0, 1, 1, 2], [0], [0]>} : vector<8x8x8xf32>, vector<8x8x32xf32>, vector<8x8x32xf32> -> vector<8x8x32xf32>
    "tpu.trace_stop"() : () -> ()
    %98 = vector.shape_cast %97 : vector<8x8x32xf32> to vector<2x4x8x32xf32>
    %cst_14 = arith.constant dense<0.000000e+00> : vector<2x8x32xf32>
    %99 = vector.multi_reduction <add>, %98, %cst_14 [1] : vector<2x4x8x32xf32> to vector<2x8x32xf32>
    %100 = vector.shape_cast %99 : vector<2x8x32xf32> to vector<16x32xf32>
    %101 = vector.broadcast %4 : vector<1x32xf32> to vector<16x32xf32>
    %102 = arith.addf %100, %101 : vector<16x32xf32>
    %103 = arith.addf %0, %102 : vector<16x32xf32>
    %cst_15 = arith.constant dense<0.000000e+00> : vector<16xf32>
    %104 = vector.multi_reduction <add>, %103, %cst_15 [1] : vector<16x32xf32> to vector<16xf32>
    %105 = vector.shape_cast %104 : vector<16xf32> to vector<16x1xf32>
    %cst_16 = arith.constant 3.200000e+01 : f32
    %106 = vector.broadcast %cst_16 : f32 to vector<16x1xf32>
    %107 = arith.divf %105, %106 : vector<16x1xf32>
    %108 = vector.broadcast %107 : vector<16x1xf32> to vector<16x32xf32>
    %109 = arith.subf %103, %108 : vector<16x32xf32>
    %110 = arith.mulf %109, %109 : vector<16x32xf32>
    %cst_17 = arith.constant dense<0.000000e+00> : vector<16xf32>
    %111 = vector.multi_reduction <add>, %110, %cst_17 [1] : vector<16x32xf32> to vector<16xf32>
    %112 = vector.shape_cast %111 : vector<16xf32> to vector<16x1xf32>
    %cst_18 = arith.constant 3.200000e+01 : f32
    %113 = vector.broadcast %cst_18 : f32 to vector<16x1xf32>
    %114 = arith.divf %112, %113 : vector<16x1xf32>
    %115 = vector.broadcast %107 : vector<16x1xf32> to vector<16x32xf32>
    %116 = arith.subf %103, %115 : vector<16x32xf32>
    %cst_19 = arith.constant 9.99999974E-6 : f32
    %117 = vector.broadcast %cst_19 : f32 to vector<16x1xf32>
    %118 = arith.addf %114, %117 : vector<16x1xf32>
    %119 = math.rsqrt %118 : vector<16x1xf32>
    %120 = vector.broadcast %119 : vector<16x1xf32> to vector<16x32xf32>
    %121 = arith.mulf %116, %120 : vector<16x32xf32>
    %122 = vector.broadcast %5 : vector<1x32xf32> to vector<16x32xf32>
    %123 = arith.mulf %121, %122 : vector<16x32xf32>
    %124 = vector.broadcast %6 : vector<1x32xf32> to vector<16x32xf32>
    %125 = arith.addf %123, %124 : vector<16x32xf32>
    %c0_20 = arith.constant 0 : index
    %c0_21 = arith.constant 0 : index
    %126 = vector.load %arg3[%c0_20, %c0_21] : memref<32x64xf32, #tpu.memory_space<vmem>>, vector<32x64xf32>
    %cst_22 = arith.constant dense<0.000000e+00> : vector<16x64xf32>
    %127 = tpu.matmul %125, %126, %cst_22 {dimension_numbers = #tpu.dot_dimension_numbers<[1], [0], [0], [1], [0, 0, 1, 1], [], []>} : vector<16x32xf32>, vector<32x64xf32>, vector<16x64xf32> -> vector<16x64xf32>
    %128 = vector.broadcast %7 : vector<1x64xf32> to vector<16x64xf32>
    %129 = arith.addf %127, %128 : vector<16x64xf32>
    %cst_23 = arith.constant 5.000000e-01 : f32
    %130 = vector.broadcast %cst_23 : f32 to vector<16x64xf32>
    %131 = arith.mulf %130, %129 : vector<16x64xf32>
    %cst_24 = arith.constant 0.707106769 : f32
    %132 = vector.broadcast %cst_24 : f32 to vector<16x64xf32>
    %133 = arith.mulf %129, %132 : vector<16x64xf32>
    %134 = math.erf %133 : vector<16x64xf32>
    %cst_25 = arith.constant 1.000000e+00 : f32
    %135 = vector.broadcast %cst_25 : f32 to vector<16x64xf32>
    %136 = arith.addf %135, %134 : vector<16x64xf32>
    %137 = arith.mulf %131, %136 : vector<16x64xf32>
    %c0_26 = arith.constant 0 : index
    %c0_27 = arith.constant 0 : index
    %138 = vector.load %arg4[%c0_26, %c0_27] : memref<64x32xf32, #tpu.memory_space<vmem>>, vector<64x32xf32>
    %cst_28 = arith.constant dense<0.000000e+00> : vector<16x32xf32>
    %139 = tpu.matmul %137, %138, %cst_28 {dimension_numbers = #tpu.dot_dimension_numbers<[1], [0], [0], [1], [0, 0, 1, 1], [], []>} : vector<16x64xf32>, vector<64x32xf32>, vector<16x32xf32> -> vector<16x32xf32>
    %140 = vector.broadcast %8 : vector<1x32xf32> to vector<16x32xf32>
    %141 = arith.addf %139, %140 : vector<16x32xf32>
    %142 = arith.addf %103, %141 : vector<16x32xf32>
    %c0_29 = arith.constant 0 : index
    %c0_30 = arith.constant 0 : index
    %143 = vector.load %arg5[%c0_29, %c0_30] : memref<16x32xf32, #tpu.memory_space<vmem>>, vector<16x32xf32>
    tpu.vector_store %arg5[%c0_29, %c0_30], %142 {strides = array<i32>} : memref<16x32xf32, #tpu.memory_space<vmem>>, vector<16x32xf32>,
    return
  }
}

</mosaic_0001>

<llo_original>
// kernel: transformer_encoder_block.1
$region0: #{transformer_encoder_block.1}
  #allocation0 [shape = 'u32[]', space=smem, size = 0x4, offset = 0x4, fixed_abs, tag = 'smem constant byte address 0x4 - core index']
  #allocation1 [shape = 'u32[144,128]{1,0:T(1,128)}', space=vmem, size = 0x12000, scoped, tag = 'internal scratch']
  %s0 = inlined_call_operand.vmem [shape: f32[16,32], index: 0, kind: input, shape index: {}]
  %s1 = inlined_call_operand.vmem [shape: f32[8,128], index: 1, kind: input, shape index: {}]
  %s2 = inlined_call_operand.vmem [shape: f32[32,192], index: 2, kind: input, shape index: {}]
  %s3 = inlined_call_operand.vmem [shape: f32[32,64], index: 3, kind: input, shape index: {}]
  %s4 = inlined_call_operand.vmem [shape: f32[64,32], index: 4, kind: input, shape index: {}]
  %s5 = inlined_call_operand.hbm [shape: f32[16,32], index: 5, kind: output, shape index: {}]
  %s6 = sld [smem:[#allocation0]]
  $region30: #{transformer_encoder_block.1} parent=0
    _
  %s8 = ssub.s32 1, %s6
  %s9 = scalar_select 0, %s8, %s6
  $region1: #{transformer_encoder_block.1} parent=0
    #allocation2 [shape = 'u8[8192]{0}', space=vmem, size = 0x2000, scoped, tag = 'output window, operand 0, single buffered']
    #allocation3 [shape = 's32[1]{0}', space=sflag, size = 0x4, scoped, tag = 'scoped memory for transformer_encoder_block.1']
    %10 = vsyncpa [#allocation3], 0
    // Predicated region
    $region2: #{transformer_encoder_block.1} parent=1 // pred_check
      _
    $region3: #{transformer_encoder_block.1} parent=1 // pred_check_branch
      %12 = sbr.rel (0) target = $region5
    $region4: #{transformer_encoder_block.1} parent=1 // pred_region
      _
    $region5: #{transformer_encoder_block.1} parent=1 // pred_fallthru
      _
    // Predicated region
    $region6: #{transformer_encoder_block.1} parent=1 // pred_check
      _
    $region7: #{transformer_encoder_block.1} parent=1 // pred_check_branch
      %14 = sbr.rel (0) target = $region9
    $region8: #{transformer_encoder_block.1} parent=1 // pred_region
      _
    $region9: #{transformer_encoder_block.1} parent=1 // pred_fallthru
      _
    // Predicated region
    $region10: #{transformer_encoder_block.1} parent=1 // pred_check
      _
    $region11: #{transformer_encoder_block.1} parent=1 // pred_check_branch
      %16 = sbr.rel (0) target = $region13
    $region12: #{transformer_encoder_block.1} parent=1 // pred_region
      _
    $region13: #{transformer_encoder_block.1} parent=1 // pred_fallthru
      _
    // Predicated region
    $region14: #{transformer_encoder_block.1} parent=1 // pred_check
      _
    $region15: #{transformer_encoder_block.1} parent=1 // pred_check_branch
      %18 = sbr.rel (0) target = $region17
    $region16: #{transformer_encoder_block.1} parent=1 // pred_region
      _
    $region17: #{transformer_encoder_block.1} parent=1 // pred_fallthru
      _
    // Predicated region
    $region18: #{transformer_encoder_block.1} parent=1 // pred_check
      _
    $region19: #{transformer_encoder_block.1} parent=1 // pred_check_branch
      %20 = sbr.rel (0) target = $region21
    $region20: #{transformer_encoder_block.1} parent=1 // pred_region
      _
    $region21: #{transformer_encoder_block.1} parent=1 // pred_fallthru
      _
    %v21 = vld [vmem:[%s0] sm:$0xff]
    %v22 = vld [vmem:[%s0 + $0x8] sm:$0xff]
    %v23 = vld [vmem:[%s1] sm:$0xff]
    %vm24 = vcmask 261120
    %v25 = vsel %vm24, %v21, 0.0
    %26 = vadd.xlane.f32.xlu0 %v25
    %v27 = vpop.xlane.xlu0 %26
    %v28 = vsel %vm24, %v22, 0.0
    %29 = vadd.xlane.f32.xlu0 %v28
    %v30 = vpop.xlane.xlu0 %29
    %v31 = vrcp.pop 32.0
    %v32 = vmul.f32 %v27, %v31
    %v33 = vmul.f32 %v30, %v31
    %v34 = vsub.f32 %v21, %v32
    %v35 = vsub.f32 %v22, %v33
    %v36 = vmul.f32 %v34, %v34
    %v37 = vmul.f32 %v35, %v35
    %v38 = vsel %vm24, %v36, 0.0
    %39 = vadd.xlane.f32.xlu0 %v38
    %v40 = vpop.xlane.xlu0 %39
    %v41 = vsel %vm24, %v37, 0.0
    %42 = vadd.xlane.f32.xlu0 %v41
    %v43 = vpop.xlane.xlu0 %42
    %v44 = vmul.f32 %v40, %v31
    %v45 = vmul.f32 %v43, %v31
    %v46 = vadd.f32 %v44, 1e-05
    %v47 = vadd.f32 %v45, 1e-05
    %v48 = vrsqrt.pop %v46
    %v49 = vrsqrt.pop %v47
    %v50 = vmul.f32 %v34, %v48
    %v51 = vmul.f32 %v35, %v49
    %v52 = vlaneseq
    %v53 = vshrl.u32 %v52, 7
    %v54 = vsub.s32 0, %v53
    %v55 = vrot.slane %v23, %v54
    %v56 = vmul.f32 %v50, %v55
    %v57 = vmul.f32 %v51, %v55
    %v58 = vlaneseq
    %v59 = vshrl.u32 %v58, 7
    %v60 = vsub.s32 1, %v59
    %v61 = vrot.slane %v23, %v60
    %v62 = vadd.f32 %v56, %v61
    %v63 = vadd.f32 %v57, %v61
    %v64 = vld [vmem:[%s2] sm:$0xff]
    %v65 = vld [vmem:[%s2 + $0x8] sm:$0xff]
    %v66 = vld [vmem:[%s2 + $0x10] sm:$0xff]
    %v67 = vld [vmem:[%s2 + $0x18] sm:$0xff]
    %v68 = vld [vmem:[%s2 + $0x20] sm:$0xff]
    %v69 = vld [vmem:[%s2 + $0x28] sm:$0xff]
    %v70 = vld [vmem:[%s2 + $0x30] sm:$0xff]
    %v71 = vld [vmem:[%s2 + $0x38] sm:$0xff]
    %v73 = vsel %vm24, %v62, 0
    %v76 = vsel %vm24, %v63, 0
    %78 = vmatprep.subr.mxu0 %v65
    %79 = vmatpush1.msra.mxu0 %v64
    %80 = vmatprep.subr.mxu0 %v67
    %81 = vmatpush1.msra.mxu0 %v66
    %82 = vmatprep.subr.mxu0 %v69
    %83 = vmatpush1.msra.mxu0 %v68
    %84 = vmatprep.subr.mxu0 %v71
    %85 = vmatpush1.msra.mxu0 %v70
    %86 = vmatprep.subr.mxu0 0.0
    %87 = vmatpush1.msra.mxu0 0.0
    %88 = vmatprep.subr.mxu0 0.0
    %89 = vmatpush1.msra.mxu0 0.0
    %90 = vmatprep.subr.mxu0 0.0
    %91 = vmatpush1.msra.mxu0 0.0
    %92 = vmatprep.subr.mxu0 0.0
    %93 = vmatpush1.msra.mxu0 0.0
    %94 = vmatprep.subr.mxu0 0.0
    %95 = vmatpush1.msra.mxu0 0.0
    %96 = vmatprep.subr.mxu0 0.0
    %97 = vmatpush1.msra.mxu0 0.0
    %98 = vmatprep.subr.mxu0 0.0
    %99 = vmatpush1.msra.mxu0 0.0
    %100 = vmatprep.subr.mxu0 0.0
    %101 = vmatpush1.msra.mxu0 0.0
    %102 = vmatprep.subr.mxu0 0.0
    %103 = vmatpush1.msra.mxu0 0.0
    %104 = vmatprep.subr.mxu0 0.0
    %105 = vmatpush1.msra.mxu0 0.0
    %106 = vmatprep.subr.mxu0 0.0
    %107 = vmatpush1.msra.mxu0 0.0
    %108 = vmatprep.subr.mxu0 0.0
    %109 = vmatpush1.msra.mxu0 0.0
    %110 = vmatprep.subr.mxu0 0.0
    %111 = vmatpush1.msra.mxu0 0.0
    %112 = vmatprep.subr.mxu0 0.0
    %113 = vmatpush1.msra.mxu0 0.0
    %114 = vmatprep.subr.mxu0 0.0
    %115 = vmatpush1.msra.mxu0 0.0
    %116 = vmatprep.subr.mxu0 0.0
    %117 = vmatpush1.msra.mxu0 0.0
    %118 = vmatprep.subr.mxu0 0.0
    %119 = vmatpush1.msra.mxu0 0.0
    %120 = vmatprep.subr.mxu0 0.0
    %121 = vmatpush1.msra.mxu0 0.0
    %122 = vmatprep.subr.mxu0 0.0
    %123 = vmatpush1.msra.mxu0 0.0
    %124 = vmatprep.subr.mxu0 0.0
    %125 = vmatpush1.msra.mxu0 0.0
    %126 = vmatprep.subr.mxu0 0.0
    %127 = vmatpush1.msra.mxu0 0.0
    %128 = vmatprep.subr.mxu0 0.0
    %129 = vmatpush1.msra.mxu0 0.0
    %130 = vmatprep.subr.mxu0 0.0
    %131 = vmatpush1.msra.mxu0 0.0
    %132 = vmatprep.subr.mxu0 0.0
    %133 = vmatpush1.msra.mxu0 0.0
    %134 = vmatprep.subr.mxu0 0.0
    %135 = vmatpush1.msra.mxu0 0.0
    %136 = vmatprep.subr.mxu0 0.0
    %137 = vmatpush1.msra.mxu0 0.0
    %138 = vmatprep.subr.mxu0 0.0
    %139 = vmatpush1.msra.mxu0 0.0
    %140 = vmatprep.subr.mxu0 0.0
    %141 = vmatpush1.msra.mxu0 0.0
    %142 = vmatprep.mubr.f32.mxu0 0.0
    %143 = vmatmul.mubr.f32.gmra.mrb[0].mxu0 %v73
    %v144 = vpop.f32.mrb[0].mxu0
    %v145 = vadd.f32 0.0, %v144
    %v146 = vpop.f32.mrb[0].mxu0
    %v147 = vadd.f32 0.0, %v146
    %148 = vmatprep.mubr.f32.mxu0 0.0
    %149 = vmatmul.mubr.f32.gmra.mrb[0].mxu0 %v76
    %v150 = vpop.f32.mrb[0].mxu0
    %v151 = vadd.f32 0.0, %v150
    %v152 = vpop.f32.mrb[0].mxu0
    %v153 = vadd.f32 0.0, %v152
    %154 = vdwg.mxu0
    %156 = vrot.lane.b32.xlu0 %v147, 120
    %v157 = vpop.permute.xlu0 %156
    %158 = vrot.lane.b32.xlu0 %v147, 112
    %v159 = vpop.permute.xlu0 %158
    %160 = vrot.lane.b32.xlu0 %v147, 104
    %v161 = vpop.permute.xlu0 %160
    %163 = vrot.lane.b32.xlu0 %v153, 120
    %v164 = vpop.permute.xlu0 %163
    %165 = vrot.lane.b32.xlu0 %v153, 112
    %v166 = vpop.permute.xlu0 %165
    %167 = vrot.lane.b32.xlu0 %v153, 104
    %v168 = vpop.permute.xlu0 %167
    %170 = vrot.lane.b32.xlu0 %v145, 96
    %v171 = vpop.permute.xlu0 %170
    %173 = vrot.lane.b32.xlu0 %v145, 64
    %v174 = vpop.permute.xlu0 %173
    %176 = vrot.lane.b32.xlu0 %v145, 32
    %v177 = vpop.permute.xlu0 %176
    %180 = vrot.lane.b32.xlu0 %v151, 96
    %v181 = vpop.permute.xlu0 %180
    %183 = vrot.lane.b32.xlu0 %v151, 64
    %v184 = vpop.permute.xlu0 %183
    %186 = vrot.lane.b32.xlu0 %v151, 32
    %v187 = vpop.permute.xlu0 %186
    %189 = vrot.lane.b32.xlu0 %v147, 96
    %v190 = vpop.permute.xlu0 %189
    %vm191 = vcmask 64512
    %v192 = vsel %vm191, %v147, 0
    %v194 = vsel %vm191, %v190, 0
    %196 = vmatprep.subr.mxu0 0.0
    %197 = vmatpush1.xpose.msra.mxu0 %v194
    %198 = vmatprep.subr.mxu0 0.0
    %199 = vmatpush1.xpose.msra.mxu0 0.0
    %200 = vmatprep.subr.mxu0 0.0
    %201 = vmatpush1.xpose.msra.mxu0 0.0
    %202 = vmatprep.subr.mxu0 0.0
    %203 = vmatpush1.xpose.msra.mxu0 0.0
    %204 = vmatprep.subr.mxu0 0.0
    %205 = vmatpush1.xpose.msra.mxu0 0.0
    %206 = vmatprep.subr.mxu0 0.0
    %207 = vmatpush1.xpose.msra.mxu0 0.0
    %208 = vmatprep.subr.mxu0 0.0
    %209 = vmatpush1.xpose.msra.mxu0 0.0
    %210 = vmatprep.subr.mxu0 0.0
    %211 = vmatpush1.xpose.msra.mxu0 0.0
    %212 = vmatprep.subr.mxu0 0.0
    %213 = vmatpush1.xpose.msra.mxu0 0.0
    %214 = vmatprep.subr.mxu0 0.0
    %215 = vmatpush1.xpose.msra.mxu0 0.0
    %216 = vmatprep.subr.mxu0 0.0
    %217 = vmatpush1.xpose.msra.mxu0 0.0
    %218 = vmatprep.subr.mxu0 0.0
    %219 = vmatpush1.xpose.msra.mxu0 0.0
    %220 = vmatprep.subr.mxu0 0.0
    %221 = vmatpush1.xpose.msra.mxu0 0.0
    %222 = vmatprep.subr.mxu0 0.0
    %223 = vmatpush1.xpose.msra.mxu0 0.0
    %224 = vmatprep.subr.mxu0 0.0
    %225 = vmatpush1.xpose.msra.mxu0 0.0
    %226 = vmatprep.subr.mxu0 0.0
    %227 = vmatpush1.xpose.msra.mxu0 0.0
    %228 = vmatprep.subr.mxu0 0.0
    %229 = vmatpush1.xpose.msra.mxu0 0.0
    %230 = vmatprep.subr.mxu0 0.0
    %231 = vmatpush1.xpose.msra.mxu0 0.0
    %232 = vmatprep.subr.mxu0 0.0
    %233 = vmatpush1.xpose.msra.mxu0 0.0
    %234 = vmatprep.subr.mxu0 0.0
    %235 = vmatpush1.xpose.msra.mxu0 0.0
    %236 = vmatprep.subr.mxu0 0.0
    %237 = vmatpush1.xpose.msra.mxu0 0.0
    %238 = vmatprep.subr.mxu0 0.0
    %239 = vmatpush1.xpose.msra.mxu0 0.0
    %240 = vmatprep.subr.mxu0 0.0
    %241 = vmatpush1.xpose.msra.mxu0 0.0
    %242 = vmatprep.subr.mxu0 0.0
    %243 = vmatpush1.xpose.msra.mxu0 0.0
    %244 = vmatprep.subr.mxu0 0.0
    %245 = vmatpush1.xpose.msra.mxu0 0.0
    %246 = vmatprep.subr.mxu0 0.0
    %247 = vmatpush1.xpose.msra.mxu0 0.0
    %248 = vmatprep.subr.mxu0 0.0
    %249 = vmatpush1.xpose.msra.mxu0 0.0
    %250 = vmatprep.subr.mxu0 0.0
    %251 = vmatpush1.xpose.msra.mxu0 0.0
    %252 = vmatprep.subr.mxu0 0.0
    %253 = vmatpush1.xpose.msra.mxu0 0.0
    %254 = vmatprep.subr.mxu0 0.0
    %255 = vmatpush1.xpose.msra.mxu0 0.0
    %256 = vmatprep.subr.mxu0 0.0
    %257 = vmatpush1.xpose.msra.mxu0 0.0
    %258 = vmatprep.subr.mxu0 0.0
    %259 = vmatpush1.xpose.msra.mxu0 0.0
    %260 = vmatprep.mubr.f32.mxu0 0.0
    %261 = vmatmul.mubr.f32.gmra.mrb[0].mxu0 %v192
    %v262 = vpop.f32.mrb[0].mxu0
    %v263 = vadd.f32 0.0, %v262
    %v264 = vpop.f32.mrb[0].mxu0
    %265 = vdwg.mxu0
    %266 = vrot.lane.b32.xlu0 %v157, 96
    %v267 = vpop.permute.xlu0 %266
    %v268 = vsel %vm191, %v157, 0
    %v270 = vsel %vm191, %v267, 0
    %272 = vmatprep.subr.mxu0 0.0
    %273 = vmatpush1.xpose.msra.mxu0 %v270
    %274 = vmatprep.subr.mxu0 0.0
    %275 = vmatpush1.xpose.msra.mxu0 0.0
    %276 = vmatprep.subr.mxu0 0.0
    %277 = vmatpush1.xpose.msra.mxu0 0.0
    %278 = vmatprep.subr.mxu0 0.0
    %279 = vmatpush1.xpose.msra.mxu0 0.0
    %280 = vmatprep.subr.mxu0 0.0
    %281 = vmatpush1.xpose.msra.mxu0 0.0
    %282 = vmatprep.subr.mxu0 0.0
    %283 = vmatpush1.xpose.msra.mxu0 0.0
    %284 = vmatprep.subr.mxu0 0.0
    %285 = vmatpush1.xpose.msra.mxu0 0.0
    %286 = vmatprep.subr.mxu0 0.0
    %287 = vmatpush1.xpose.msra.mxu0 0.0
    %288 = vmatprep.subr.mxu0 0.0
    %289 = vmatpush1.xpose.msra.mxu0 0.0
    %290 = vmatprep.subr.mxu0 0.0
    %291 = vmatpush1.xpose.msra.mxu0 0.0
    %292 = vmatprep.subr.mxu0 0.0
    %293 = vmatpush1.xpose.msra.mxu0 0.0
    %294 = vmatprep.subr.mxu0 0.0
    %295 = vmatpush1.xpose.msra.mxu0 0.0
    %296 = vmatprep.subr.mxu0 0.0
    %297 = vmatpush1.xpose.msra.mxu0 0.0
    %298 = vmatprep.subr.mxu0 0.0
    %299 = vmatpush1.xpose.msra.mxu0 0.0
    %300 = vmatprep.subr.mxu0 0.0
    %301 = vmatpush1.xpose.msra.mxu0 0.0
    %302 = vmatprep.subr.mxu0 0.0
    %303 = vmatpush1.xpose.msra.mxu0 0.0
    %304 = vmatprep.subr.mxu0 0.0
    %305 = vmatpush1.xpose.msra.mxu0 0.0
    %306 = vmatprep.subr.mxu0 0.0
    %307 = vmatpush1.xpose.msra.mxu0 0.0
    %308 = vmatprep.subr.mxu0 0.0
    %309 = vmatpush1.xpose.msra.mxu0 0.0
    %310 = vmatprep.subr.mxu0 0.0
    %311 = vmatpush1.xpose.msra.mxu0 0.0
    %312 = vmatprep.subr.mxu0 0.0
    %313 = vmatpush1.xpose.msra.mxu0 0.0
    %314 = vmatprep.subr.mxu0 0.0
    %315 = vmatpush1.xpose.msra.mxu0 0.0
    %316 = vmatprep.subr.mxu0 0.0
    %317 = vmatpush1.xpose.msra.mxu0 0.0
    %318 = vmatprep.subr.mxu0 0.0
    %319 = vmatpush1.xpose.msra.mxu0 0.0
    %320 = vmatprep.subr.mxu0 0.0
    %321 = vmatpush1.xpose.msra.mxu0 0.0
    %322 = vmatprep.subr.mxu0 0.0
    %323 = vmatpush1.xpose.msra.mxu0 0.0
    %324 = vmatprep.subr.mxu0 0.0
    %325 = vmatpush1.xpose.msra.mxu0 0.0
    %326 = vmatprep.subr.mxu0 0.0
    %327 = vmatpush1.xpose.msra.mxu0 0.0
    %328 = vmatprep.subr.mxu0 0.0
    %329 = vmatpush1.xpose.msra.mxu0 0.0
    %330 = vmatprep.subr.mxu0 0.0
    %331 = vmatpush1.xpose.msra.mxu0 0.0
    %332 = vmatprep.subr.mxu0 0.0
    %333 = vmatpush1.xpose.msra.mxu0 0.0
    %334 = vmatprep.subr.mxu0 0.0
    %335 = vmatpush1.xpose.msra.mxu0 0.0
    %336 = vmatprep.mubr.f32.mxu0 0.0
    %337 = vmatmul.mubr.f32.gmra.mrb[0].mxu0 %v268
    %v338 = vpop.f32.mrb[0].mxu0
    %v339 = vadd.f32 0.0, %v338
    %v340 = vpop.f32.mrb[0].mxu0
    %341 = vdwg.mxu0
    %342 = vrot.lane.b32.xlu0 %v159, 96
    %v343 = vpop.permute.xlu0 %342
    %v344 = vsel %vm191, %v159, 0
    %v346 = vsel %vm191, %v343, 0
    %348 = vmatprep.subr.mxu0 0.0
    %349 = vmatpush1.xpose.msra.mxu0 %v346
    %350 = vmatprep.subr.mxu0 0.0
    %351 = vmatpush1.xpose.msra.mxu0 0.0
    %352 = vmatprep.subr.mxu0 0.0
    %353 = vmatpush1.xpose.msra.mxu0 0.0
    %354 = vmatprep.subr.mxu0 0.0
    %355 = vmatpush1.xpose.msra.mxu0 0.0
    %356 = vmatprep.subr.mxu0 0.0
    %357 = vmatpush1.xpose.msra.mxu0 0.0
    %358 = vmatprep.subr.mxu0 0.0
    %359 = vmatpush1.xpose.msra.mxu0 0.0
    %360 = vmatprep.subr.mxu0 0.0
    %361 = vmatpush1.xpose.msra.mxu0 0.0
    %362 = vmatprep.subr.mxu0 0.0
    %363 = vmatpush1.xpose.msra.mxu0 0.0
    %364 = vmatprep.subr.mxu0 0.0
    %365 = vmatpush1.xpose.msra.mxu0 0.0
    %366 = vmatprep.subr.mxu0 0.0
    %367 = vmatpush1.xpose.msra.mxu0 0.0
    %368 = vmatprep.subr.mxu0 0.0
    %369 = vmatpush1.xpose.msra.mxu0 0.0
    %370 = vmatprep.subr.mxu0 0.0
    %371 = vmatpush1.xpose.msra.mxu0 0.0
    %372 = vmatprep.subr.mxu0 0.0
    %373 = vmatpush1.xpose.msra.mxu0 0.0
    %374 = vmatprep.subr.mxu0 0.0
    %375 = vmatpush1.xpose.msra.mxu0 0.0
    %376 = vmatprep.subr.mxu0 0.0
    %377 = vmatpush1.xpose.msra.mxu0 0.0
    %378 = vmatprep.subr.mxu0 0.0
    %379 = vmatpush1.xpose.msra.mxu0 0.0
    %380 = vmatprep.subr.mxu0 0.0
    %381 = vmatpush1.xpose.msra.mxu0 0.0
    %382 = vmatprep.subr.mxu0 0.0
    %383 = vmatpush1.xpose.msra.mxu0 0.0
    %384 = vmatprep.subr.mxu0 0.0
    %385 = vmatpush1.xpose.msra.mxu0 0.0
    %386 = vmatprep.subr.mxu0 0.0
    %387 = vmatpush1.xpose.msra.mxu0 0.0
    %388 = vmatprep.subr.mxu0 0.0
    %389 = vmatpush1.xpose.msra.mxu0 0.0
    %390 = vmatprep.subr.mxu0 0.0
    %391 = vmatpush1.xpose.msra.mxu0 0.0
    %392 = vmatprep.subr.mxu0 0.0
    %393 = vmatpush1.xpose.msra.mxu0 0.0
    %394 = vmatprep.subr.mxu0 0.0
    %395 = vmatpush1.xpose.msra.mxu0 0.0
    %396 = vmatprep.subr.mxu0 0.0
    %397 = vmatpush1.xpose.msra.mxu0 0.0
    %398 = vmatprep.subr.mxu0 0.0
    %399 = vmatpush1.xpose.msra.mxu0 0.0
    %400 = vmatprep.subr.mxu0 0.0
    %401 = vmatpush1.xpose.msra.mxu0 0.0
    %402 = vmatprep.subr.mxu0 0.0
    %403 = vmatpush1.xpose.msra.mxu0 0.0
    %404 = vmatprep.subr.mxu0 0.0
    %405 = vmatpush1.xpose.msra.mxu0 0.0
    %406 = vmatprep.subr.mxu0 0.0
    %407 = vmatpush1.xpose.msra.mxu0 0.0
    %408 = vmatprep.subr.mxu0 0.0
    %409 = vmatpush1.xpose.msra.mxu0 0.0
    %410 = vmatprep.subr.mxu0 0.0
    %411 = vmatpush1.xpose.msra.mxu0 0.0
    %412 = vmatprep.mubr.f32.mxu0 0.0
    %413 = vmatmul.mubr.f32.gmra.mrb[0].mxu0 %v344
    %v414 = vpop.f32.mrb[0].mxu0
    %v415 = vadd.f32 0.0, %v414
    %v416 = vpop.f32.mrb[0].mxu0
    %417 = vdwg.mxu0
    %418 = vrot.lane.b32.xlu0 %v161, 96
    %v419 = vpop.permute.xlu0 %418
    %v420 = vsel %vm191, %v161, 0
    %v422 = vsel %vm191, %v419, 0
    %424 = vmatprep.subr.mxu0 0.0
    %425 = vmatpush1.xpose.msra.mxu0 %v422
    %426 = vmatprep.subr.mxu0 0.0
    %427 = vmatpush1.xpose.msra.mxu0 0.0
    %428 = vmatprep.subr.mxu0 0.0
    %429 = vmatpush1.xpose.msra.mxu0 0.0
    %430 = vmatprep.subr.mxu0 0.0
    %431 = vmatpush1.xpose.msra.mxu0 0.0
    %432 = vmatprep.subr.mxu0 0.0
    %433 = vmatpush1.xpose.msra.mxu0 0.0
    %434 = vmatprep.subr.mxu0 0.0
    %435 = vmatpush1.xpose.msra.mxu0 0.0
    %436 = vmatprep.subr.mxu0 0.0
    %437 = vmatpush1.xpose.msra.mxu0 0.0
    %438 = vmatprep.subr.mxu0 0.0
    %439 = vmatpush1.xpose.msra.mxu0 0.0
    %440 = vmatprep.subr.mxu0 0.0
    %441 = vmatpush1.xpose.msra.mxu0 0.0
    %442 = vmatprep.subr.mxu0 0.0
    %443 = vmatpush1.xpose.msra.mxu0 0.0
    %444 = vmatprep.subr.mxu0 0.0
    %445 = vmatpush1.xpose.msra.mxu0 0.0
    %446 = vmatprep.subr.mxu0 0.0
    %447 = vmatpush1.xpose.msra.mxu0 0.0
    %448 = vmatprep.subr.mxu0 0.0
    %449 = vmatpush1.xpose.msra.mxu0 0.0
    %450 = vmatprep.subr.mxu0 0.0
    %451 = vmatpush1.xpose.msra.mxu0 0.0
    %452 = vmatprep.subr.mxu0 0.0
    %453 = vmatpush1.xpose.msra.mxu0 0.0
    %454 = vmatprep.subr.mxu0 0.0
    %455 = vmatpush1.xpose.msra.mxu0 0.0
    %456 = vmatprep.subr.mxu0 0.0
    %457 = vmatpush1.xpose.msra.mxu0 0.0
    %458 = vmatprep.subr.mxu0 0.0
    %459 = vmatpush1.xpose.msra.mxu0 0.0
    %460 = vmatprep.subr.mxu0 0.0
    %461 = vmatpush1.xpose.msra.mxu0 0.0
    %462 = vmatprep.subr.mxu0 0.0
    %463 = vmatpush1.xpose.msra.mxu0 0.0
    %464 = vmatprep.subr.mxu0 0.0
    %465 = vmatpush1.xpose.msra.mxu0 0.0
    %466 = vmatprep.subr.mxu0 0.0
    %467 = vmatpush1.xpose.msra.mxu0 0.0
    %468 = vmatprep.subr.mxu0 0.0
    %469 = vmatpush1.xpose.msra.mxu0 0.0
    %470 = vmatprep.subr.mxu0 0.0
    %471 = vmatpush1.xpose.msra.mxu0 0.0
    %472 = vmatprep.subr.mxu0 0.0
    %473 = vmatpush1.xpose.msra.mxu0 0.0
    %474 = vmatprep.subr.mxu0 0.0
    %475 = vmatpush1.xpose.msra.mxu0 0.0
    %476 = vmatprep.subr.mxu0 0.0
    %477 = vmatpush1.xpose.msra.mxu0 0.0
    %478 = vmatprep.subr.mxu0 0.0
    %479 = vmatpush1.xpose.msra.mxu0 0.0
    %480 = vmatprep.subr.mxu0 0.0
    %481 = vmatpush1.xpose.msra.mxu0 0.0
    %482 = vmatprep.subr.mxu0 0.0
    %483 = vmatpush1.xpose.msra.mxu0 0.0
    %484 = vmatprep.subr.mxu0 0.0
    %485 = vmatpush1.xpose.msra.mxu0 0.0
    %486 = vmatprep.subr.mxu0 0.0
    %487 = vmatpush1.xpose.msra.mxu0 0.0
    %488 = vmatprep.mubr.f32.mxu0 0.0
    %489 = vmatmul.mubr.f32.gmra.mrb[0].mxu0 %v420
    %v490 = vpop.f32.mrb[0].mxu0
    %v491 = vadd.f32 0.0, %v490
    %v492 = vpop.f32.mrb[0].mxu0
    %493 = vdwg.mxu0
    %494 = vrot.lane.b32.xlu0 %v153, 96
    %v495 = vpop.permute.xlu0 %494
    %v496 = vsel %vm191, %v153, 0
    %v498 = vsel %vm191, %v495, 0
    %500 = vmatprep.subr.mxu0 0.0
    %501 = vmatpush1.xpose.msra.mxu0 %v498
    %502 = vmatprep.subr.mxu0 0.0
    %503 = vmatpush1.xpose.msra.mxu0 0.0
    %504 = vmatprep.subr.mxu0 0.0
    %505 = vmatpush1.xpose.msra.mxu0 0.0
    %506 = vmatprep.subr.mxu0 0.0
    %507 = vmatpush1.xpose.msra.mxu0 0.0
    %508 = vmatprep.subr.mxu0 0.0
    %509 = vmatpush1.xpose.msra.mxu0 0.0
    %510 = vmatprep.subr.mxu0 0.0
    %511 = vmatpush1.xpose.msra.mxu0 0.0
    %512 = vmatprep.subr.mxu0 0.0
    %513 = vmatpush1.xpose.msra.mxu0 0.0
    %514 = vmatprep.subr.mxu0 0.0
    %515 = vmatpush1.xpose.msra.mxu0 0.0
    %516 = vmatprep.subr.mxu0 0.0
    %517 = vmatpush1.xpose.msra.mxu0 0.0
    %518 = vmatprep.subr.mxu0 0.0
    %519 = vmatpush1.xpose.msra.mxu0 0.0
    %520 = vmatprep.subr.mxu0 0.0
    %521 = vmatpush1.xpose.msra.mxu0 0.0
    %522 = vmatprep.subr.mxu0 0.0
    %523 = vmatpush1.xpose.msra.mxu0 0.0
    %524 = vmatprep.subr.mxu0 0.0
    %525 = vmatpush1.xpose.msra.mxu0 0.0
    %526 = vmatprep.subr.mxu0 0.0
    %527 = vmatpush1.xpose.msra.mxu0 0.0
    %528 = vmatprep.subr.mxu0 0.0
    %529 = vmatpush1.xpose.msra.mxu0 0.0
    %530 = vmatprep.subr.mxu0 0.0
    %531 = vmatpush1.xpose.msra.mxu0 0.0
    %532 = vmatprep.subr.mxu0 0.0
    %533 = vmatpush1.xpose.msra.mxu0 0.0
    %534 = vmatprep.subr.mxu0 0.0
    %535 = vmatpush1.xpose.msra.mxu0 0.0
    %536 = vmatprep.subr.mxu0 0.0
    %537 = vmatpush1.xpose.msra.mxu0 0.0
    %538 = vmatprep.subr.mxu0 0.0
    %539 = vmatpush1.xpose.msra.mxu0 0.0
    %540 = vmatprep.subr.mxu0 0.0
    %541 = vmatpush1.xpose.msra.mxu0 0.0
    %542 = vmatprep.subr.mxu0 0.0
    %543 = vmatpush1.xpose.msra.mxu0 0.0
    %544 = vmatprep.subr.mxu0 0.0
    %545 = vmatpush1.xpose.msra.mxu0 0.0
    %546 = vmatprep.subr.mxu0 0.0
    %547 = vmatpush1.xpose.msra.mxu0 0.0
    %548 = vmatprep.subr.mxu0 0.0
    %549 = vmatpush1.xpose.msra.mxu0 0.0
    %550 = vmatprep.subr.mxu0 0.0
    %551 = vmatpush1.xpose.msra.mxu0 0.0
    %552 = vmatprep.subr.mxu0 0.0
    %553 = vmatpush1.xpose.msra.mxu0 0.0
    %554 = vmatprep.subr.mxu0 0.0
    %555 = vmatpush1.xpose.msra.mxu0 0.0
    %556 = vmatprep.subr.mxu0 0.0
    %557 = vmatpush1.xpose.msra.mxu0 0.0
    %558 = vmatprep.subr.mxu0 0.0
    %559 = vmatpush1.xpose.msra.mxu0 0.0
    %560 = vmatprep.subr.mxu0 0.0
    %561 = vmatpush1.xpose.msra.mxu0 0.0
    %562 = vmatprep.subr.mxu0 0.0
    %563 = vmatpush1.xpose.msra.mxu0 0.0
    %564 = vmatprep.mubr.f32.mxu0 0.0
    %565 = vmatmul.mubr.f32.gmra.mrb[0].mxu0 %v496
    %v566 = vpop.f32.mrb[0].mxu0
    %v567 = vadd.f32 0.0, %v566
    %v568 = vpop.f32.mrb[0].mxu0
    %569 = vdwg.mxu0
    %570 = vrot.lane.b32.xlu0 %v164, 96
    %v571 = vpop.permute.xlu0 %570
    %v572 = vsel %vm191, %v164, 0
    %v574 = vsel %vm191, %v571, 0
    %576 = vmatprep.subr.mxu0 0.0
    %577 = vmatpush1.xpose.msra.mxu0 %v574
    %578 = vmatprep.subr.mxu0 0.0
    %579 = vmatpush1.xpose.msra.mxu0 0.0
    %580 = vmatprep.subr.mxu0 0.0
    %581 = vmatpush1.xpose.msra.mxu0 0.0
    %582 = vmatprep.subr.mxu0 0.0
    %583 = vmatpush1.xpose.msra.mxu0 0.0
    %584 = vmatprep.subr.mxu0 0.0
    %585 = vmatpush1.xpose.msra.mxu0 0.0
    %586 = vmatprep.subr.mxu0 0.0
    %587 = vmatpush1.xpose.msra.mxu0 0.0
    %588 = vmatprep.subr.mxu0 0.0
    %589 = vmatpush1.xpose.msra.mxu0 0.0
    %590 = vmatprep.subr.mxu0 0.0
    %591 = vmatpush1.xpose.msra.mxu0 0.0
    %592 = vmatprep.subr.mxu0 0.0
    %593 = vmatpush1.xpose.msra.mxu0 0.0
    %594 = vmatprep.subr.mxu0 0.0
    %595 = vmatpush1.xpose.msra.mxu0 0.0
    %596 = vmatprep.subr.mxu0 0.0
    %597 = vmatpush1.xpose.msra.mxu0 0.0
    %598 = vmatprep.subr.mxu0 0.0
    %599 = vmatpush1.xpose.msra.mxu0 0.0
    %600 = vmatprep.subr.mxu0 0.0
    %601 = vmatpush1.xpose.msra.mxu0 0.0
    %602 = vmatprep.subr.mxu0 0.0
    %603 = vmatpush1.xpose.msra.mxu0 0.0
    %604 = vmatprep.subr.mxu0 0.0
    %605 = vmatpush1.xpose.msra.mxu0 0.0
    %606 = vmatprep.subr.mxu0 0.0
    %607 = vmatpush1.xpose.msra.mxu0 0.0
    %608 = vmatprep.subr.mxu0 0.0
    %609 = vmatpush1.xpose.msra.mxu0 0.0
    %610 = vmatprep.subr.mxu0 0.0
    %611 = vmatpush1.xpose.msra.mxu0 0.0
    %612 = vmatprep.subr.mxu0 0.0
    %613 = vmatpush1.xpose.msra.mxu0 0.0
    %614 = vmatprep.subr.mxu0 0.0
    %615 = vmatpush1.xpose.msra.mxu0 0.0
    %616 = vmatprep.subr.mxu0 0.0
    %617 = vmatpush1.xpose.msra.mxu0 0.0
    %618 = vmatprep.subr.mxu0 0.0
    %619 = vmatpush1.xpose.msra.mxu0 0.0
    %620 = vmatprep.subr.mxu0 0.0
    %621 = vmatpush1.xpose.msra.mxu0 0.0
    %622 = vmatprep.subr.mxu0 0.0
    %623 = vmatpush1.xpose.msra.mxu0 0.0
    %624 = vmatprep.subr.mxu0 0.0
    %625 = vmatpush1.xpose.msra.mxu0 0.0
    %626 = vmatprep.subr.mxu0 0.0
    %627 = vmatpush1.xpose.msra.mxu0 0.0
    %628 = vmatprep.subr.mxu0 0.0
    %629 = vmatpush1.xpose.msra.mxu0 0.0
    %630 = vmatprep.subr.mxu0 0.0
    %631 = vmatpush1.xpose.msra.mxu0 0.0
    %632 = vmatprep.subr.mxu0 0.0
    %633 = vmatpush1.xpose.msra.mxu0 0.0
    %634 = vmatprep.subr.mxu0 0.0
    %635 = vmatpush1.xpose.msra.mxu0 0.0
    %636 = vmatprep.subr.mxu0 0.0
    %637 = vmatpush1.xpose.msra.mxu0 0.0
    %638 = vmatprep.subr.mxu0 0.0
    %639 = vmatpush1.xpose.msra.mxu0 0.0
    %640 = vmatprep.mubr.f32.mxu0 0.0
    %641 = vmatmul.mubr.f32.gmra.mrb[0].mxu0 %v572
    %v642 = vpop.f32.mrb[0].mxu0
    %v643 = vadd.f32 0.0, %v642
    %v644 = vpop.f32.mrb[0].mxu0
    %645 = vdwg.mxu0
    %646 = vrot.lane.b32.xlu0 %v166, 96
    %v647 = vpop.permute.xlu0 %646
    %v648 = vsel %vm191, %v166, 0
    %v650 = vsel %vm191, %v647, 0
    %652 = vmatprep.subr.mxu0 0.0
    %653 = vmatpush1.xpose.msra.mxu0 %v650
    %654 = vmatprep.subr.mxu0 0.0
    %655 = vmatpush1.xpose.msra.mxu0 0.0
    %656 = vmatprep.subr.mxu0 0.0
    %657 = vmatpush1.xpose.msra.mxu0 0.0
    %658 = vmatprep.subr.mxu0 0.0
    %659 = vmatpush1.xpose.msra.mxu0 0.0
    %660 = vmatprep.subr.mxu0 0.0
    %661 = vmatpush1.xpose.msra.mxu0 0.0
    %662 = vmatprep.subr.mxu0 0.0
    %663 = vmatpush1.xpose.msra.mxu0 0.0
    %664 = vmatprep.subr.mxu0 0.0
    %665 = vmatpush1.xpose.msra.mxu0 0.0
    %666 = vmatprep.subr.mxu0 0.0
    %667 = vmatpush1.xpose.msra.mxu0 0.0
    %668 = vmatprep.subr.mxu0 0.0
    %669 = vmatpush1.xpose.msra.mxu0 0.0
    %670 = vmatprep.subr.mxu0 0.0
    %671 = vmatpush1.xpose.msra.mxu0 0.0
    %672 = vmatprep.subr.mxu0 0.0
    %673 = vmatpush1.xpose.msra.mxu0 0.0
    %674 = vmatprep.subr.mxu0 0.0
    %675 = vmatpush1.xpose.msra.mxu0 0.0
    %676 = vmatprep.subr.mxu0 0.0
    %677 = vmatpush1.xpose.msra.mxu0 0.0
    %678 = vmatprep.subr.mxu0 0.0
    %679 = vmatpush1.xpose.msra.mxu0 0.0
    %680 = vmatprep.subr.mxu0 0.0
    %681 = vmatpush1.xpose.msra.mxu0 0.0
    %682 = vmatprep.subr.mxu0 0.0
    %683 = vmatpush1.xpose.msra.mxu0 0.0
    %684 = vmatprep.subr.mxu0 0.0
    %685 = vmatpush1.xpose.msra.mxu0 0.0
    %686 = vmatprep.subr.mxu0 0.0
    %687 = vmatpush1.xpose.msra.mxu0 0.0
    %688 = vmatprep.subr.mxu0 0.0
    %689 = vmatpush1.xpose.msra.mxu0 0.0
    %690 = vmatprep.subr.mxu0 0.0
    %691 = vmatpush1.xpose.msra.mxu0 0.0
    %692 = vmatprep.subr.mxu0 0.0
    %693 = vmatpush1.xpose.msra.mxu0 0.0
    %694 = vmatprep.subr.mxu0 0.0
    %695 = vmatpush1.xpose.msra.mxu0 0.0
    %696 = vmatprep.subr.mxu0 0.0
    %697 = vmatpush1.xpose.msra.mxu0 0.0
    %698 = vmatprep.subr.mxu0 0.0
    %699 = vmatpush1.xpose.msra.mxu0 0.0
    %700 = vmatprep.subr.mxu0 0.0
    %701 = vmatpush1.xpose.msra.mxu0 0.0
    %702 = vmatprep.subr.mxu0 0.0
    %703 = vmatpush1.xpose.msra.mxu0 0.0
    %704 = vmatprep.subr.mxu0 0.0
    %705 = vmatpush1.xpose.msra.mxu0 0.0
    %706 = vmatprep.subr.mxu0 0.0
    %707 = vmatpush1.xpose.msra.mxu0 0.0
    %708 = vmatprep.subr.mxu0 0.0
    %709 = vmatpush1.xpose.msra.mxu0 0.0
    %710 = vmatprep.subr.mxu0 0.0
    %711 = vmatpush1.xpose.msra.mxu0 0.0
    %712 = vmatprep.subr.mxu0 0.0
    %713 = vmatpush1.xpose.msra.mxu0 0.0
    %714 = vmatprep.subr.mxu0 0.0
    %715 = vmatpush1.xpose.msra.mxu0 0.0
    %716 = vmatprep.mubr.f32.mxu0 0.0
    %717 = vmatmul.mubr.f32.gmra.mrb[0].mxu0 %v648
    %v718 = vpop.f32.mrb[0].mxu0
    %v719 = vadd.f32 0.0, %v718
    %v720 = vpop.f32.mrb[0].mxu0
    %721 = vdwg.mxu0
    %722 = vrot.lane.b32.xlu0 %v168, 96
    %v723 = vpop.permute.xlu0 %722
    %v724 = vsel %vm191, %v168, 0
    %v726 = vsel %vm191, %v723, 0
    %728 = vmatprep.subr.mxu0 0.0
    %729 = vmatpush1.xpose.msra.mxu0 %v726
    %730 = vmatprep.subr.mxu0 0.0
    %731 = vmatpush1.xpose.msra.mxu0 0.0
    %732 = vmatprep.subr.mxu0 0.0
    %733 = vmatpush1.xpose.msra.mxu0 0.0
    %734 = vmatprep.subr.mxu0 0.0
    %735 = vmatpush1.xpose.msra.mxu0 0.0
    %736 = vmatprep.subr.mxu0 0.0
    %737 = vmatpush1.xpose.msra.mxu0 0.0
    %738 = vmatprep.subr.mxu0 0.0
    %739 = vmatpush1.xpose.msra.mxu0 0.0
    %740 = vmatprep.subr.mxu0 0.0
    %741 = vmatpush1.xpose.msra.mxu0 0.0
    %742 = vmatprep.subr.mxu0 0.0
    %743 = vmatpush1.xpose.msra.mxu0 0.0
    %744 = vmatprep.subr.mxu0 0.0
    %745 = vmatpush1.xpose.msra.mxu0 0.0
    %746 = vmatprep.subr.mxu0 0.0
    %747 = vmatpush1.xpose.msra.mxu0 0.0
    %748 = vmatprep.subr.mxu0 0.0
    %749 = vmatpush1.xpose.msra.mxu0 0.0
    %750 = vmatprep.subr.mxu0 0.0
    %751 = vmatpush1.xpose.msra.mxu0 0.0
    %752 = vmatprep.subr.mxu0 0.0
    %753 = vmatpush1.xpose.msra.mxu0 0.0
    %754 = vmatprep.subr.mxu0 0.0
    %755 = vmatpush1.xpose.msra.mxu0 0.0
    %756 = vmatprep.subr.mxu0 0.0
    %757 = vmatpush1.xpose.msra.mxu0 0.0
    %758 = vmatprep.subr.mxu0 0.0
    %759 = vmatpush1.xpose.msra.mxu0 0.0
    %760 = vmatprep.subr.mxu0 0.0
    %761 = vmatpush1.xpose.msra.mxu0 0.0
    %762 = vmatprep.subr.mxu0 0.0
    %763 = vmatpush1.xpose.msra.mxu0 0.0
    %764 = vmatprep.subr.mxu0 0.0
    %765 = vmatpush1.xpose.msra.mxu0 0.0
    %766 = vmatprep.subr.mxu0 0.0
    %767 = vmatpush1.xpose.msra.mxu0 0.0
    %768 = vmatprep.subr.mxu0 0.0
    %769 = vmatpush1.xpose.msra.mxu0 0.0
    %770 = vmatprep.subr.mxu0 0.0
    %771 = vmatpush1.xpose.msra.mxu0 0.0
    %772 = vmatprep.subr.mxu0 0.0
    %773 = vmatpush1.xpose.msra.mxu0 0.0
    %774 = vmatprep.subr.mxu0 0.0
    %775 = vmatpush1.xpose.msra.mxu0 0.0
    %776 = vmatprep.subr.mxu0 0.0
    %777 = vmatpush1.xpose.msra.mxu0 0.0
    %778 = vmatprep.subr.mxu0 0.0
    %779 = vmatpush1.xpose.msra.mxu0 0.0
    %780 = vmatprep.subr.mxu0 0.0
    %781 = vmatpush1.xpose.msra.mxu0 0.0
    %782 = vmatprep.subr.mxu0 0.0
    %783 = vmatpush1.xpose.msra.mxu0 0.0
    %784 = vmatprep.subr.mxu0 0.0
    %785 = vmatpush1.xpose.msra.mxu0 0.0
    %786 = vmatprep.subr.mxu0 0.0
    %787 = vmatpush1.xpose.msra.mxu0 0.0
    %788 = vmatprep.subr.mxu0 0.0
    %789 = vmatpush1.xpose.msra.mxu0 0.0
    %790 = vmatprep.subr.mxu0 0.0
    %791 = vmatpush1.xpose.msra.mxu0 0.0
    %792 = vmatprep.mubr.f32.mxu0 0.0
    %793 = vmatmul.mubr.f32.gmra.mrb[0].mxu0 %v724
    %v794 = vpop.f32.mrb[0].mxu0
    %v795 = vadd.f32 0.0, %v794
    %v796 = vpop.f32.mrb[0].mxu0
    %797 = vdwg.mxu0
    %v798 = vsel %vm191, %v263, -inf
    %799 = vmax.xlane.f32.xlu0 %v798
    %v800 = vpop.xlane.xlu0 %799
    %v801 = vsel %vm191, %v339, -inf
    %802 = vmax.xlane.f32.xlu0 %v801
    %v803 = vpop.xlane.xlu0 %802
    %v804 = vsel %vm191, %v415, -inf
    %805 = vmax.xlane.f32.xlu0 %v804
    %v806 = vpop.xlane.xlu0 %805
    %v807 = vsel %vm191, %v491, -inf
    %808 = vmax.xlane.f32.xlu0 %v807
    %v809 = vpop.xlane.xlu0 %808
    %v810 = vsel %vm191, %v567, -inf
    %811 = vmax.xlane.f32.xlu0 %v810
    %v812 = vpop.xlane.xlu0 %811
    %v813 = vsel %vm191, %v643, -inf
    %814 = vmax.xlane.f32.xlu0 %v813
    %v815 = vpop.xlane.xlu0 %814
    %v816 = vsel %vm191, %v719, -inf
    %817 = vmax.xlane.f32.xlu0 %v816
    %v818 = vpop.xlane.xlu0 %817
    %v819 = vsel %vm191, %v795, -inf
    %820 = vmax.xlane.f32.xlu0 %v819
    %v821 = vpop.xlane.xlu0 %820
    %v822 = vsub.f32 %v263, %v800
    %v823 = vsub.f32 %v339, %v803
    %v824 = vsub.f32 %v415, %v806
    %v825 = vsub.f32 %v491, %v809
    %v826 = vsub.f32 %v567, %v812
    %v827 = vsub.f32 %v643, %v815
    %v828 = vsub.f32 %v719, %v818
    %v829 = vsub.f32 %v795, %v821
    %v830 = vmul.f32 %v822, 1.442695
    %v831 = vpow.pop %v830
    %v832 = vmul.f32 %v823, 1.442695
    %v833 = vpow.pop %v832
    %v834 = vmul.f32 %v824, 1.442695
    %v835 = vpow.pop %v834
    %v836 = vmul.f32 %v825, 1.442695
    %v837 = vpow.pop %v836
    %v838 = vmul.f32 %v826, 1.442695
    %v839 = vpow.pop %v838
    %v840 = vmul.f32 %v827, 1.442695
    %v841 = vpow.pop %v840
    %v842 = vmul.f32 %v828, 1.442695
    %v843 = vpow.pop %v842
    %v844 = vmul.f32 %v829, 1.442695
    %v845 = vpow.pop %v844
    %v846 = vsel %vm191, %v831, 0.0
    %847 = vadd.xlane.f32.xlu0 %v846
    %v848 = vpop.xlane.xlu0 %847
    %v849 = vsel %vm191, %v833, 0.0
    %850 = vadd.xlane.f32.xlu0 %v849
    %v851 = vpop.xlane.xlu0 %850
    %v852 = vsel %vm191, %v835, 0.0
    %853 = vadd.xlane.f32.xlu0 %v852
    %v854 = vpop.xlane.xlu0 %853
    %v855 = vsel %vm191, %v837, 0.0
    %856 = vadd.xlane.f32.xlu0 %v855
    %v857 = vpop.xlane.xlu0 %856
    %v858 = vsel %vm191, %v839, 0.0
    %859 = vadd.xlane.f32.xlu0 %v858
    %v860 = vpop.xlane.xlu0 %859
    %v861 = vsel %vm191, %v841, 0.0
    %862 = vadd.xlane.f32.xlu0 %v861
    %v863 = vpop.xlane.xlu0 %862
    %v864 = vsel %vm191, %v843, 0.0
    %865 = vadd.xlane.f32.xlu0 %v864
    %v866 = vpop.xlane.xlu0 %865
    %v867 = vsel %vm191, %v845, 0.0
    %868 = vadd.xlane.f32.xlu0 %v867
    %v869 = vpop.xlane.xlu0 %868
    %v870 = vrcp.pop %v848
    %v871 = vmul.f32 %v831, %v870
    %v872 = vrcp.pop %v851
    %v873 = vmul.f32 %v833, %v872
    %v874 = vrcp.pop %v854
    %v875 = vmul.f32 %v835, %v874
    %v876 = vrcp.pop %v857
    %v877 = vmul.f32 %v837, %v876
    %v878 = vrcp.pop %v860
    %v879 = vmul.f32 %v839, %v878
    %v880 = vrcp.pop %v863
    %v881 = vmul.f32 %v841, %v880
    %v882 = vrcp.pop %v866
    %v883 = vmul.f32 %v843, %v882
    %v884 = vrcp.pop %v869
    %v885 = vmul.f32 %v845, %v884
    %v887 = vsel %vm191, %v871, 0
    %889 = vmatprep.subr.mxu0 0.0
    %890 = vmatpush1.msra.mxu0 %v145
    %891 = vmatprep.subr.mxu0 0.0
    %892 = vmatpush1.msra.mxu0 0.0
    %893 = vmatprep.subr.mxu0 0.0
    %894 = vmatpush1.msra.mxu0 0.0
    %895 = vmatprep.subr.mxu0 0.0
    %896 = vmatpush1.msra.mxu0 0.0
    %897 = vmatprep.subr.mxu0 0.0
    %898 = vmatpush1.msra.mxu0 0.0
    %899 = vmatprep.subr.mxu0 0.0
    %900 = vmatpush1.msra.mxu0 0.0
    %901 = vmatprep.subr.mxu0 0.0
    %902 = vmatpush1.msra.mxu0 0.0
    %903 = vmatprep.subr.mxu0 0.0
    %904 = vmatpush1.msra.mxu0 0.0
    %905 = vmatprep.subr.mxu0 0.0
    %906 = vmatpush1.msra.mxu0 0.0
    %907 = vmatprep.subr.mxu0 0.0
    %908 = vmatpush1.msra.mxu0 0.0
    %909 = vmatprep.subr.mxu0 0.0
    %910 = vmatpush1.msra.mxu0 0.0
    %911 = vmatprep.subr.mxu0 0.0
    %912 = vmatpush1.msra.mxu0 0.0
    %913 = vmatprep.subr.mxu0 0.0
    %914 = vmatpush1.msra.mxu0 0.0
    %915 = vmatprep.subr.mxu0 0.0
    %916 = vmatpush1.msra.mxu0 0.0
    %917 = vmatprep.subr.mxu0 0.0
    %918 = vmatpush1.msra.mxu0 0.0
    %919 = vmatprep.subr.mxu0 0.0
    %920 = vmatpush1.msra.mxu0 0.0
    %921 = vmatprep.subr.mxu0 0.0
    %922 = vmatpush1.msra.mxu0 0.0
    %923 = vmatprep.subr.mxu0 0.0
    %924 = vmatpush1.msra.mxu0 0.0
    %925 = vmatprep.subr.mxu0 0.0
    %926 = vmatpush1.msra.mxu0 0.0
    %927 = vmatprep.subr.mxu0 0.0
    %928 = vmatpush1.msra.mxu0 0.0
    %929 = vmatprep.subr.mxu0 0.0
    %930 = vmatpush1.msra.mxu0 0.0
    %931 = vmatprep.subr.mxu0 0.0
    %932 = vmatpush1.msra.mxu0 0.0
    %933 = vmatprep.subr.mxu0 0.0
    %934 = vmatpush1.msra.mxu0 0.0
    %935 = vmatprep.subr.mxu0 0.0
    %936 = vmatpush1.msra.mxu0 0.0
    %937 = vmatprep.subr.mxu0 0.0
    %938 = vmatpush1.msra.mxu0 0.0
    %939 = vmatprep.subr.mxu0 0.0
    %940 = vmatpush1.msra.mxu0 0.0
    %941 = vmatprep.subr.mxu0 0.0
    %942 = vmatpush1.msra.mxu0 0.0
    %943 = vmatprep.subr.mxu0 0.0
    %944 = vmatpush1.msra.mxu0 0.0
    %945 = vmatprep.subr.mxu0 0.0
    %946 = vmatpush1.msra.mxu0 0.0
    %947 = vmatprep.subr.mxu0 0.0
    %948 = vmatpush1.msra.mxu0 0.0
    %949 = vmatprep.subr.mxu0 0.0
    %950 = vmatpush1.msra.mxu0 0.0
    %951 = vmatprep.subr.mxu0 0.0
    %952 = vmatpush1.msra.mxu0 0.0
    %953 = vmatprep.mubr.f32.mxu0 0.0
    %954 = vmatmul.mubr.f32.gmra.mrb[0].mxu0 %v887
    %v955 = vpop.f32.mrb[0].mxu0
    %v956 = vadd.f32 0.0, %v955
    %v957 = vpop.f32.mrb[0].mxu0
    %958 = vdwg.mxu0
    %v960 = vsel %vm191, %v873, 0
    %962 = vmatprep.subr.mxu0 0.0
    %963 = vmatpush1.msra.mxu0 %v171
    %964 = vmatprep.subr.mxu0 0.0
    %965 = vmatpush1.msra.mxu0 0.0
    %966 = vmatprep.subr.mxu0 0.0
    %967 = vmatpush1.msra.mxu0 0.0
    %968 = vmatprep.subr.mxu0 0.0
    %969 = vmatpush1.msra.mxu0 0.0
    %970 = vmatprep.subr.mxu0 0.0
    %971 = vmatpush1.msra.mxu0 0.0
    %972 = vmatprep.subr.mxu0 0.0
    %973 = vmatpush1.msra.mxu0 0.0
    %974 = vmatprep.subr.mxu0 0.0
    %975 = vmatpush1.msra.mxu0 0.0
    %976 = vmatprep.subr.mxu0 0.0
    %977 = vmatpush1.msra.mxu0 0.0
    %978 = vmatprep.subr.mxu0 0.0
    %979 = vmatpush1.msra.mxu0 0.0
    %980 = vmatprep.subr.mxu0 0.0
    %981 = vmatpush1.msra.mxu0 0.0
    %982 = vmatprep.subr.mxu0 0.0
    %983 = vmatpush1.msra.mxu0 0.0
    %984 = vmatprep.subr.mxu0 0.0
    %985 = vmatpush1.msra.mxu0 0.0
    %986 = vmatprep.subr.mxu0 0.0
    %987 = vmatpush1.msra.mxu0 0.0
    %988 = vmatprep.subr.mxu0 0.0
    %989 = vmatpush1.msra.mxu0 0.0
    %990 = vmatprep.subr.mxu0 0.0
    %991 = vmatpush1.msra.mxu0 0.0
    %992 = vmatprep.subr.mxu0 0.0
    %993 = vmatpush1.msra.mxu0 0.0
    %994 = vmatprep.subr.mxu0 0.0
    %995 = vmatpush1.msra.mxu0 0.0
    %996 = vmatprep.subr.mxu0 0.0
    %997 = vmatpush1.msra.mxu0 0.0
    %998 = vmatprep.subr.mxu0 0.0
    %999 = vmatpush1.msra.mxu0 0.0
    %1000 = vmatprep.subr.mxu0 0.0
    %1001 = vmatpush1.msra.mxu0 0.0
    %1002 = vmatprep.subr.mxu0 0.0
    %1003 = vmatpush1.msra.mxu0 0.0
    %1004 = vmatprep.subr.mxu0 0.0
    %1005 = vmatpush1.msra.mxu0 0.0
    %1006 = vmatprep.subr.mxu0 0.0
    %1007 = vmatpush1.msra.mxu0 0.0
    %1008 = vmatprep.subr.mxu0 0.0
    %1009 = vmatpush1.msra.mxu0 0.0
    %1010 = vmatprep.subr.mxu0 0.0
    %1011 = vmatpush1.msra.mxu0 0.0
    %1012 = vmatprep.subr.mxu0 0.0
    %1013 = vmatpush1.msra.mxu0 0.0
    %1014 = vmatprep.subr.mxu0 0.0
    %1015 = vmatpush1.msra.mxu0 0.0
    %1016 = vmatprep.subr.mxu0 0.0
    %1017 = vmatpush1.msra.mxu0 0.0
    %1018 = vmatprep.subr.mxu0 0.0
    %1019 = vmatpush1.msra.mxu0 0.0
    %1020 = vmatprep.subr.mxu0 0.0
    %1021 = vmatpush1.msra.mxu0 0.0
    %1022 = vmatprep.subr.mxu0 0.0
    %1023 = vmatpush1.msra.mxu0 0.0
    %1024 = vmatprep.subr.mxu0 0.0
    %1025 = vmatpush1.msra.mxu0 0.0
    %1026 = vmatprep.mubr.f32.mxu0 0.0
    %1027 = vmatmul.mubr.f32.gmra.mrb[0].mxu0 %v960
    %v1028 = vpop.f32.mrb[0].mxu0
    %v1029 = vadd.f32 0.0, %v1028
    %v1030 = vpop.f32.mrb[0].mxu0
    %1031 = vdwg.mxu0
    %v1033 = vsel %vm191, %v875, 0
    %1035 = vmatprep.subr.mxu0 0.0
    %1036 = vmatpush1.msra.mxu0 %v174
    %1037 = vmatprep.subr.mxu0 0.0
    %1038 = vmatpush1.msra.mxu0 0.0
    %1039 = vmatprep.subr.mxu0 0.0
    %1040 = vmatpush1.msra.mxu0 0.0
    %1041 = vmatprep.subr.mxu0 0.0
    %1042 = vmatpush1.msra.mxu0 0.0
    %1043 = vmatprep.subr.mxu0 0.0
    %1044 = vmatpush1.msra.mxu0 0.0
    %1045 = vmatprep.subr.mxu0 0.0
    %1046 = vmatpush1.msra.mxu0 0.0
    %1047 = vmatprep.subr.mxu0 0.0
    %1048 = vmatpush1.msra.mxu0 0.0
    %1049 = vmatprep.subr.mxu0 0.0
    %1050 = vmatpush1.msra.mxu0 0.0
    %1051 = vmatprep.subr.mxu0 0.0
    %1052 = vmatpush1.msra.mxu0 0.0
    %1053 = vmatprep.subr.mxu0 0.0
    %1054 = vmatpush1.msra.mxu0 0.0
    %1055 = vmatprep.subr.mxu0 0.0
    %1056 = vmatpush1.msra.mxu0 0.0
    %1057 = vmatprep.subr.mxu0 0.0
    %1058 = vmatpush1.msra.mxu0 0.0
    %1059 = vmatprep.subr.mxu0 0.0
    %1060 = vmatpush1.msra.mxu0 0.0
    %1061 = vmatprep.subr.mxu0 0.0
    %1062 = vmatpush1.msra.mxu0 0.0
    %1063 = vmatprep.subr.mxu0 0.0
    %1064 = vmatpush1.msra.mxu0 0.0
    %1065 = vmatprep.subr.mxu0 0.0
    %1066 = vmatpush1.msra.mxu0 0.0
    %1067 = vmatprep.subr.mxu0 0.0
    %1068 = vmatpush1.msra.mxu0 0.0
    %1069 = vmatprep.subr.mxu0 0.0
    %1070 = vmatpush1.msra.mxu0 0.0
    %1071 = vmatprep.subr.mxu0 0.0
    %1072 = vmatpush1.msra.mxu0 0.0
    %1073 = vmatprep.subr.mxu0 0.0
    %1074 = vmatpush1.msra.mxu0 0.0
    %1075 = vmatprep.subr.mxu0 0.0
    %1076 = vmatpush1.msra.mxu0 0.0
    %1077 = vmatprep.subr.mxu0 0.0
    %1078 = vmatpush1.msra.mxu0 0.0
    %1079 = vmatprep.subr.mxu0 0.0
    %1080 = vmatpush1.msra.mxu0 0.0
    %1081 = vmatprep.subr.mxu0 0.0
    %1082 = vmatpush1.msra.mxu0 0.0
    %1083 = vmatprep.subr.mxu0 0.0
    %1084 = vmatpush1.msra.mxu0 0.0
    %1085 = vmatprep.subr.mxu0 0.0
    %1086 = vmatpush1.msra.mxu0 0.0
    %1087 = vmatprep.subr.mxu0 0.0
    %1088 = vmatpush1.msra.mxu0 0.0
    %1089 = vmatprep.subr.mxu0 0.0
    %1090 = vmatpush1.msra.mxu0 0.0
    %1091 = vmatprep.subr.mxu0 0.0
    %1092 = vmatpush1.msra.mxu0 0.0
    %1093 = vmatprep.subr.mxu0 0.0
    %1094 = vmatpush1.msra.mxu0 0.0
    %1095 = vmatprep.subr.mxu0 0.0
    %1096 = vmatpush1.msra.mxu0 0.0
    %1097 = vmatprep.subr.mxu0 0.0
    %1098 = vmatpush1.msra.mxu0 0.0
    %1099 = vmatprep.mubr.f32.mxu0 0.0
    %1100 = vmatmul.mubr.f32.gmra.mrb[0].mxu0 %v1033
    %v1101 = vpop.f32.mrb[0].mxu0
    %v1102 = vadd.f32 0.0, %v1101
    %v1103 = vpop.f32.mrb[0].mxu0
    %1104 = vdwg.mxu0
    %v1106 = vsel %vm191, %v877, 0
    %1108 = vmatprep.subr.mxu0 0.0
    %1109 = vmatpush1.msra.mxu0 %v177
    %1110 = vmatprep.subr.mxu0 0.0
    %1111 = vmatpush1.msra.mxu0 0.0
    %1112 = vmatprep.subr.mxu0 0.0
    %1113 = vmatpush1.msra.mxu0 0.0
    %1114 = vmatprep.subr.mxu0 0.0
    %1115 = vmatpush1.msra.mxu0 0.0
    %1116 = vmatprep.subr.mxu0 0.0
    %1117 = vmatpush1.msra.mxu0 0.0
    %1118 = vmatprep.subr.mxu0 0.0
    %1119 = vmatpush1.msra.mxu0 0.0
    %1120 = vmatprep.subr.mxu0 0.0
    %1121 = vmatpush1.msra.mxu0 0.0
    %1122 = vmatprep.subr.mxu0 0.0
    %1123 = vmatpush1.msra.mxu0 0.0
    %1124 = vmatprep.subr.mxu0 0.0
    %1125 = vmatpush1.msra.mxu0 0.0
    %1126 = vmatprep.subr.mxu0 0.0
    %1127 = vmatpush1.msra.mxu0 0.0
    %1128 = vmatprep.subr.mxu0 0.0
    %1129 = vmatpush1.msra.mxu0 0.0
    %1130 = vmatprep.subr.mxu0 0.0
    %1131 = vmatpush1.msra.mxu0 0.0
    %1132 = vmatprep.subr.mxu0 0.0
    %1133 = vmatpush1.msra.mxu0 0.0
    %1134 = vmatprep.subr.mxu0 0.0
    %1135 = vmatpush1.msra.mxu0 0.0
    %1136 = vmatprep.subr.mxu0 0.0
    %1137 = vmatpush1.msra.mxu0 0.0
    %1138 = vmatprep.subr.mxu0 0.0
    %1139 = vmatpush1.msra.mxu0 0.0
    %1140 = vmatprep.subr.mxu0 0.0
    %1141 = vmatpush1.msra.mxu0 0.0
    %1142 = vmatprep.subr.mxu0 0.0
    %1143 = vmatpush1.msra.mxu0 0.0
    %1144 = vmatprep.subr.mxu0 0.0
    %1145 = vmatpush1.msra.mxu0 0.0
    %1146 = vmatprep.subr.mxu0 0.0
    %1147 = vmatpush1.msra.mxu0 0.0
    %1148 = vmatprep.subr.mxu0 0.0
    %1149 = vmatpush1.msra.mxu0 0.0
    %1150 = vmatprep.subr.mxu0 0.0
    %1151 = vmatpush1.msra.mxu0 0.0
    %1152 = vmatprep.subr.mxu0 0.0
    %1153 = vmatpush1.msra.mxu0 0.0
    %1154 = vmatprep.subr.mxu0 0.0
    %1155 = vmatpush1.msra.mxu0 0.0
    %1156 = vmatprep.subr.mxu0 0.0
    %1157 = vmatpush1.msra.mxu0 0.0
    %1158 = vmatprep.subr.mxu0 0.0
    %1159 = vmatpush1.msra.mxu0 0.0
    %1160 = vmatprep.subr.mxu0 0.0
    %1161 = vmatpush1.msra.mxu0 0.0
    %1162 = vmatprep.subr.mxu0 0.0
    %1163 = vmatpush1.msra.mxu0 0.0
    %1164 = vmatprep.subr.mxu0 0.0
    %1165 = vmatpush1.msra.mxu0 0.0
    %1166 = vmatprep.subr.mxu0 0.0
    %1167 = vmatpush1.msra.mxu0 0.0
    %1168 = vmatprep.subr.mxu0 0.0
    %1169 = vmatpush1.msra.mxu0 0.0
    %1170 = vmatprep.subr.mxu0 0.0
    %1171 = vmatpush1.msra.mxu0 0.0
    %1172 = vmatprep.mubr.f32.mxu0 0.0
    %1173 = vmatmul.mubr.f32.gmra.mrb[0].mxu0 %v1106
    %v1174 = vpop.f32.mrb[0].mxu0
    %v1175 = vadd.f32 0.0, %v1174
    %v1176 = vpop.f32.mrb[0].mxu0
    %1177 = vdwg.mxu0
    %v1179 = vsel %vm191, %v879, 0
    %1181 = vmatprep.subr.mxu0 0.0
    %1182 = vmatpush1.msra.mxu0 %v151
    %1183 = vmatprep.subr.mxu0 0.0
    %1184 = vmatpush1.msra.mxu0 0.0
    %1185 = vmatprep.subr.mxu0 0.0
    %1186 = vmatpush1.msra.mxu0 0.0
    %1187 = vmatprep.subr.mxu0 0.0
    %1188 = vmatpush1.msra.mxu0 0.0
    %1189 = vmatprep.subr.mxu0 0.0
    %1190 = vmatpush1.msra.mxu0 0.0
    %1191 = vmatprep.subr.mxu0 0.0
    %1192 = vmatpush1.msra.mxu0 0.0
    %1193 = vmatprep.subr.mxu0 0.0
    %1194 = vmatpush1.msra.mxu0 0.0
    %1195 = vmatprep.subr.mxu0 0.0
    %1196 = vmatpush1.msra.mxu0 0.0
    %1197 = vmatprep.subr.mxu0 0.0
    %1198 = vmatpush1.msra.mxu0 0.0
    %1199 = vmatprep.subr.mxu0 0.0
    %1200 = vmatpush1.msra.mxu0 0.0
    %1201 = vmatprep.subr.mxu0 0.0
    %1202 = vmatpush1.msra.mxu0 0.0
    %1203 = vmatprep.subr.mxu0 0.0
    %1204 = vmatpush1.msra.mxu0 0.0
    %1205 = vmatprep.subr.mxu0 0.0
    %1206 = vmatpush1.msra.mxu0 0.0
    %1207 = vmatprep.subr.mxu0 0.0
    %1208 = vmatpush1.msra.mxu0 0.0
    %1209 = vmatprep.subr.mxu0 0.0
    %1210 = vmatpush1.msra.mxu0 0.0
    %1211 = vmatprep.subr.mxu0 0.0
    %1212 = vmatpush1.msra.mxu0 0.0
    %1213 = vmatprep.subr.mxu0 0.0
    %1214 = vmatpush1.msra.mxu0 0.0
    %1215 = vmatprep.subr.mxu0 0.0
    %1216 = vmatpush1.msra.mxu0 0.0
    %1217 = vmatprep.subr.mxu0 0.0
    %1218 = vmatpush1.msra.mxu0 0.0
    %1219 = vmatprep.subr.mxu0 0.0
    %1220 = vmatpush1.msra.mxu0 0.0
    %1221 = vmatprep.subr.mxu0 0.0
    %1222 = vmatpush1.msra.mxu0 0.0
    %1223 = vmatprep.subr.mxu0 0.0
    %1224 = vmatpush1.msra.mxu0 0.0
    %1225 = vmatprep.subr.mxu0 0.0
    %1226 = vmatpush1.msra.mxu0 0.0
    %1227 = vmatprep.subr.mxu0 0.0
    %1228 = vmatpush1.msra.mxu0 0.0
    %1229 = vmatprep.subr.mxu0 0.0
    %1230 = vmatpush1.msra.mxu0 0.0
    %1231 = vmatprep.subr.mxu0 0.0
    %1232 = vmatpush1.msra.mxu0 0.0
    %1233 = vmatprep.subr.mxu0 0.0
    %1234 = vmatpush1.msra.mxu0 0.0
    %1235 = vmatprep.subr.mxu0 0.0
    %1236 = vmatpush1.msra.mxu0 0.0
    %1237 = vmatprep.subr.mxu0 0.0
    %1238 = vmatpush1.msra.mxu0 0.0
    %1239 = vmatprep.subr.mxu0 0.0
    %1240 = vmatpush1.msra.mxu0 0.0
    %1241 = vmatprep.subr.mxu0 0.0
    %1242 = vmatpush1.msra.mxu0 0.0
    %1243 = vmatprep.subr.mxu0 0.0
    %1244 = vmatpush1.msra.mxu0 0.0
    %1245 = vmatprep.mubr.f32.mxu0 0.0
    %1246 = vmatmul.mubr.f32.gmra.mrb[0].mxu0 %v1179
    %v1247 = vpop.f32.mrb[0].mxu0
    %v1248 = vadd.f32 0.0, %v1247
    %v1249 = vpop.f32.mrb[0].mxu0
    %1250 = vdwg.mxu0
    %v1252 = vsel %vm191, %v881, 0
    %1254 = vmatprep.subr.mxu0 0.0
    %1255 = vmatpush1.msra.mxu0 %v181
    %1256 = vmatprep.subr.mxu0 0.0
    %1257 = vmatpush1.msra.mxu0 0.0
    %1258 = vmatprep.subr.mxu0 0.0
    %1259 = vmatpush1.msra.mxu0 0.0
    %1260 = vmatprep.subr.mxu0 0.0
    %1261 = vmatpush1.msra.mxu0 0.0
    %1262 = vmatprep.subr.mxu0 0.0
    %1263 = vmatpush1.msra.mxu0 0.0
    %1264 = vmatprep.subr.mxu0 0.0
    %1265 = vmatpush1.msra.mxu0 0.0
    %1266 = vmatprep.subr.mxu0 0.0
    %1267 = vmatpush1.msra.mxu0 0.0
    %1268 = vmatprep.subr.mxu0 0.0
    %1269 = vmatpush1.msra.mxu0 0.0
    %1270 = vmatprep.subr.mxu0 0.0
    %1271 = vmatpush1.msra.mxu0 0.0
    %1272 = vmatprep.subr.mxu0 0.0
    %1273 = vmatpush1.msra.mxu0 0.0
    %1274 = vmatprep.subr.mxu0 0.0
    %1275 = vmatpush1.msra.mxu0 0.0
    %1276 = vmatprep.subr.mxu0 0.0
    %1277 = vmatpush1.msra.mxu0 0.0
    %1278 = vmatprep.subr.mxu0 0.0
    %1279 = vmatpush1.msra.mxu0 0.0
    %1280 = vmatprep.subr.mxu0 0.0
    %1281 = vmatpush1.msra.mxu0 0.0
    %1282 = vmatprep.subr.mxu0 0.0
    %1283 = vmatpush1.msra.mxu0 0.0
    %1284 = vmatprep.subr.mxu0 0.0
    %1285 = vmatpush1.msra.mxu0 0.0
    %1286 = vmatprep.subr.mxu0 0.0
    %1287 = vmatpush1.msra.mxu0 0.0
    %1288 = vmatprep.subr.mxu0 0.0
    %1289 = vmatpush1.msra.mxu0 0.0
    %1290 = vmatprep.subr.mxu0 0.0
    %1291 = vmatpush1.msra.mxu0 0.0
    %1292 = vmatprep.subr.mxu0 0.0
    %1293 = vmatpush1.msra.mxu0 0.0
    %1294 = vmatprep.subr.mxu0 0.0
    %1295 = vmatpush1.msra.mxu0 0.0
    %1296 = vmatprep.subr.mxu0 0.0
    %1297 = vmatpush1.msra.mxu0 0.0
    %1298 = vmatprep.subr.mxu0 0.0
    %1299 = vmatpush1.msra.mxu0 0.0
    %1300 = vmatprep.subr.mxu0 0.0
    %1301 = vmatpush1.msra.mxu0 0.0
    %1302 = vmatprep.subr.mxu0 0.0
    %1303 = vmatpush1.msra.mxu0 0.0
    %1304 = vmatprep.subr.mxu0 0.0
    %1305 = vmatpush1.msra.mxu0 0.0
    %1306 = vmatprep.subr.mxu0 0.0
    %1307 = vmatpush1.msra.mxu0 0.0
    %1308 = vmatprep.subr.mxu0 0.0
    %1309 = vmatpush1.msra.mxu0 0.0
    %1310 = vmatprep.subr.mxu0 0.0
    %1311 = vmatpush1.msra.mxu0 0.0
    %1312 = vmatprep.subr.mxu0 0.0
    %1313 = vmatpush1.msra.mxu0 0.0
    %1314 = vmatprep.subr.mxu0 0.0
    %1315 = vmatpush1.msra.mxu0 0.0
    %1316 = vmatprep.subr.mxu0 0.0
    %1317 = vmatpush1.msra.mxu0 0.0
    %1318 = vmatprep.mubr.f32.mxu0 0.0
    %1319 = vmatmul.mubr.f32.gmra.mrb[0].mxu0 %v1252
    %v1320 = vpop.f32.mrb[0].mxu0
    %v1321 = vadd.f32 0.0, %v1320
    %v1322 = vpop.f32.mrb[0].mxu0
    %1323 = vdwg.mxu0
    %v1325 = vsel %vm191, %v883, 0
    %1327 = vmatprep.subr.mxu0 0.0
    %1328 = vmatpush1.msra.mxu0 %v184
    %1329 = vmatprep.subr.mxu0 0.0
    %1330 = vmatpush1.msra.mxu0 0.0
    %1331 = vmatprep.subr.mxu0 0.0
    %1332 = vmatpush1.msra.mxu0 0.0
    %1333 = vmatprep.subr.mxu0 0.0
    %1334 = vmatpush1.msra.mxu0 0.0
    %1335 = vmatprep.subr.mxu0 0.0
    %1336 = vmatpush1.msra.mxu0 0.0
    %1337 = vmatprep.subr.mxu0 0.0
    %1338 = vmatpush1.msra.mxu0 0.0
    %1339 = vmatprep.subr.mxu0 0.0
    %1340 = vmatpush1.msra.mxu0 0.0
    %1341 = vmatprep.subr.mxu0 0.0
    %1342 = vmatpush1.msra.mxu0 0.0
    %1343 = vmatprep.subr.mxu0 0.0
    %1344 = vmatpush1.msra.mxu0 0.0
    %1345 = vmatprep.subr.mxu0 0.0
    %1346 = vmatpush1.msra.mxu0 0.0
    %1347 = vmatprep.subr.mxu0 0.0
    %1348 = vmatpush1.msra.mxu0 0.0
    %1349 = vmatprep.subr.mxu0 0.0
    %1350 = vmatpush1.msra.mxu0 0.0
    %1351 = vmatprep.subr.mxu0 0.0
    %1352 = vmatpush1.msra.mxu0 0.0
    %1353 = vmatprep.subr.mxu0 0.0
    %1354 = vmatpush1.msra.mxu0 0.0
    %1355 = vmatprep.subr.mxu0 0.0
    %1356 = vmatpush1.msra.mxu0 0.0
    %1357 = vmatprep.subr.mxu0 0.0
    %1358 = vmatpush1.msra.mxu0 0.0
    %1359 = vmatprep.subr.mxu0 0.0
    %1360 = vmatpush1.msra.mxu0 0.0
    %1361 = vmatprep.subr.mxu0 0.0
    %1362 = vmatpush1.msra.mxu0 0.0
    %1363 = vmatprep.subr.mxu0 0.0
    %1364 = vmatpush1.msra.mxu0 0.0
    %1365 = vmatprep.subr.mxu0 0.0
    %1366 = vmatpush1.msra.mxu0 0.0
    %1367 = vmatprep.subr.mxu0 0.0
    %1368 = vmatpush1.msra.mxu0 0.0
    %1369 = vmatprep.subr.mxu0 0.0
    %1370 = vmatpush1.msra.mxu0 0.0
    %1371 = vmatprep.subr.mxu0 0.0
    %1372 = vmatpush1.msra.mxu0 0.0
    %1373 = vmatprep.subr.mxu0 0.0
    %1374 = vmatpush1.msra.mxu0 0.0
    %1375 = vmatprep.subr.mxu0 0.0
    %1376 = vmatpush1.msra.mxu0 0.0
    %1377 = vmatprep.subr.mxu0 0.0
    %1378 = vmatpush1.msra.mxu0 0.0
    %1379 = vmatprep.subr.mxu0 0.0
    %1380 = vmatpush1.msra.mxu0 0.0
    %1381 = vmatprep.subr.mxu0 0.0
    %1382 = vmatpush1.msra.mxu0 0.0
    %1383 = vmatprep.subr.mxu0 0.0
    %1384 = vmatpush1.msra.mxu0 0.0
    %1385 = vmatprep.subr.mxu0 0.0
    %1386 = vmatpush1.msra.mxu0 0.0
    %1387 = vmatprep.subr.mxu0 0.0
    %1388 = vmatpush1.msra.mxu0 0.0
    %1389 = vmatprep.subr.mxu0 0.0
    %1390 = vmatpush1.msra.mxu0 0.0
    %1391 = vmatprep.mubr.f32.mxu0 0.0
    %1392 = vmatmul.mubr.f32.gmra.mrb[0].mxu0 %v1325
    %v1393 = vpop.f32.mrb[0].mxu0
    %v1394 = vadd.f32 0.0, %v1393
    %v1395 = vpop.f32.mrb[0].mxu0
    %1396 = vdwg.mxu0
    %v1398 = vsel %vm191, %v885, 0
    %1400 = vmatprep.subr.mxu0 0.0
    %1401 = vmatpush1.msra.mxu0 %v187
    %1402 = vmatprep.subr.mxu0 0.0
    %1403 = vmatpush1.msra.mxu0 0.0
    %1404 = vmatprep.subr.mxu0 0.0
    %1405 = vmatpush1.msra.mxu0 0.0
    %1406 = vmatprep.subr.mxu0 0.0
    %1407 = vmatpush1.msra.mxu0 0.0
    %1408 = vmatprep.subr.mxu0 0.0
    %1409 = vmatpush1.msra.mxu0 0.0
    %1410 = vmatprep.subr.mxu0 0.0
    %1411 = vmatpush1.msra.mxu0 0.0
    %1412 = vmatprep.subr.mxu0 0.0
    %1413 = vmatpush1.msra.mxu0 0.0
    %1414 = vmatprep.subr.mxu0 0.0
    %1415 = vmatpush1.msra.mxu0 0.0
    %1416 = vmatprep.subr.mxu0 0.0
    %1417 = vmatpush1.msra.mxu0 0.0
    %1418 = vmatprep.subr.mxu0 0.0
    %1419 = vmatpush1.msra.mxu0 0.0
    %1420 = vmatprep.subr.mxu0 0.0
    %1421 = vmatpush1.msra.mxu0 0.0
    %1422 = vmatprep.subr.mxu0 0.0
    %1423 = vmatpush1.msra.mxu0 0.0
    %1424 = vmatprep.subr.mxu0 0.0
    %1425 = vmatpush1.msra.mxu0 0.0
    %1426 = vmatprep.subr.mxu0 0.0
    %1427 = vmatpush1.msra.mxu0 0.0
    %1428 = vmatprep.subr.mxu0 0.0
    %1429 = vmatpush1.msra.mxu0 0.0
    %1430 = vmatprep.subr.mxu0 0.0
    %1431 = vmatpush1.msra.mxu0 0.0
    %1432 = vmatprep.subr.mxu0 0.0
    %1433 = vmatpush1.msra.mxu0 0.0
    %1434 = vmatprep.subr.mxu0 0.0
    %1435 = vmatpush1.msra.mxu0 0.0
    %1436 = vmatprep.subr.mxu0 0.0
    %1437 = vmatpush1.msra.mxu0 0.0
    %1438 = vmatprep.subr.mxu0 0.0
    %1439 = vmatpush1.msra.mxu0 0.0
    %1440 = vmatprep.subr.mxu0 0.0
    %1441 = vmatpush1.msra.mxu0 0.0
    %1442 = vmatprep.subr.mxu0 0.0
    %1443 = vmatpush1.msra.mxu0 0.0
    %1444 = vmatprep.subr.mxu0 0.0
    %1445 = vmatpush1.msra.mxu0 0.0
    %1446 = vmatprep.subr.mxu0 0.0
    %1447 = vmatpush1.msra.mxu0 0.0
    %1448 = vmatprep.subr.mxu0 0.0
    %1449 = vmatpush1.msra.mxu0 0.0
    %1450 = vmatprep.subr.mxu0 0.0
    %1451 = vmatpush1.msra.mxu0 0.0
    %1452 = vmatprep.subr.mxu0 0.0
    %1453 = vmatpush1.msra.mxu0 0.0
    %1454 = vmatprep.subr.mxu0 0.0
    %1455 = vmatpush1.msra.mxu0 0.0
    %1456 = vmatprep.subr.mxu0 0.0
    %1457 = vmatpush1.msra.mxu0 0.0
    %1458 = vmatprep.subr.mxu0 0.0
    %1459 = vmatpush1.msra.mxu0 0.0
    %1460 = vmatprep.subr.mxu0 0.0
    %1461 = vmatpush1.msra.mxu0 0.0
    %1462 = vmatprep.subr.mxu0 0.0
    %1463 = vmatpush1.msra.mxu0 0.0
    %1464 = vmatprep.mubr.f32.mxu0 0.0
    %1465 = vmatmul.mubr.f32.gmra.mrb[0].mxu0 %v1398
    %v1466 = vpop.f32.mrb[0].mxu0
    %v1467 = vadd.f32 0.0, %v1466
    %v1468 = vpop.f32.mrb[0].mxu0
    %1469 = vdwg.mxu0
    %v1470 = vsel %vm24, %v956, 0.0
    %v1471 = vsel %vm24, %v1029, 0.0
    %v1472 = vadd.f32 %v1470, %v1471
    %v1473 = vsel %vm24, %v1102, 0.0
    %v1474 = vadd.f32 %v1472, %v1473
    %v1475 = vsel %vm24, %v1175, 0.0
    %v1476 = vadd.f32 %v1474, %v1475
    %v1477 = vsel %vm24, %v1248, 0.0
    %v1478 = vsel %vm24, %v1321, 0.0
    %v1479 = vadd.f32 %v1477, %v1478
    %v1480 = vsel %vm24, %v1394, 0.0
    %v1481 = vadd.f32 %v1479, %v1480
    %v1482 = vsel %vm24, %v1467, 0.0
    %v1483 = vadd.f32 %v1481, %v1482
    %v1484 = vlaneseq
    %v1485 = vshrl.u32 %v1484, 7
    %v1486 = vsub.s32 2, %v1485
    %v1487 = vrot.slane %v23, %v1486
    %v1488 = vadd.f32 %v1476, %v1487
    %v1489 = vadd.f32 %v1483, %v1487
    %v1490 = vadd.f32 %v21, %v1488
    %v1491 = vadd.f32 %v22, %v1489
    %v1492 = vsel %vm24, %v1490, 0.0
    %1493 = vadd.xlane.f32.xlu0 %v1492
    %v1494 = vpop.xlane.xlu0 %1493
    %v1495 = vsel %vm24, %v1491, 0.0
    %1496 = vadd.xlane.f32.xlu0 %v1495
    %v1497 = vpop.xlane.xlu0 %1496
    %v1498 = vmul.f32 %v1494, %v31
    %v1499 = vmul.f32 %v1497, %v31
    %v1500 = vsub.f32 %v1490, %v1498
    %v1501 = vsub.f32 %v1491, %v1499
    %v1502 = vmul.f32 %v1500, %v1500
    %v1503 = vmul.f32 %v1501, %v1501
    %v1504 = vsel %vm24, %v1502, 0.0
    %1505 = vadd.xlane.f32.xlu0 %v1504
    %v1506 = vpop.xlane.xlu0 %1505
    %v1507 = vsel %vm24, %v1503, 0.0
    %1508 = vadd.xlane.f32.xlu0 %v1507
    %v1509 = vpop.xlane.xlu0 %1508
    %v1510 = vmul.f32 %v1506, %v31
    %v1511 = vmul.f32 %v1509, %v31
    %v1512 = vadd.f32 %v1510, 1e-05
    %v1513 = vadd.f32 %v1511, 1e-05
    %v1514 = vrsqrt.pop %v1512
    %v1515 = vrsqrt.pop %v1513
    %v1516 = vmul.f32 %v1500, %v1514
    %v1517 = vmul.f32 %v1501, %v1515
    %v1518 = vlaneseq
    %v1519 = vshrl.u32 %v1518, 7
    %v1520 = vsub.s32 3, %v1519
    %v1521 = vrot.slane %v23, %v1520
    %v1522 = vmul.f32 %v1516, %v1521
    %v1523 = vmul.f32 %v1517, %v1521
    %v1524 = vlaneseq
    %v1525 = vshrl.u32 %v1524, 7
    %v1526 = vsub.s32 4, %v1525
    %v1527 = vrot.slane %v23, %v1526
    %v1528 = vadd.f32 %v1522, %v1527
    %v1529 = vadd.f32 %v1523, %v1527
    %v1530 = vld [vmem:[%s3] sm:$0xff]
    %v1531 = vld [vmem:[%s3 + $0x8] sm:$0xff]
    %v1532 = vld [vmem:[%s3 + $0x10] sm:$0xff]
    %v1533 = vld [vmem:[%s3 + $0x18] sm:$0xff]
    %v1534 = vlaneseq
    %v1535 = vshrl.u32 %v1534, 7
    %v1536 = vsub.s32 5, %v1535
    %v1537 = vrot.slane %v23, %v1536
    %v1539 = vsel %vm24, %v1528, 0
    %v1542 = vsel %vm24, %v1529, 0
    %1544 = vmatprep.subr.mxu0 0.0
    %1545 = vmatpush1.msra.mxu0 %v1530
    %1546 = vmatprep.subr.mxu0 0.0
    %1547 = vmatpush1.msra.mxu0 %v1531
    %1548 = vmatprep.subr.mxu0 0.0
    %1549 = vmatpush1.msra.mxu0 %v1532
    %1550 = vmatprep.subr.mxu0 0.0
    %1551 = vmatpush1.msra.mxu0 %v1533
    %1552 = vmatprep.subr.mxu0 0.0
    %1553 = vmatpush1.msra.mxu0 0.0
    %1554 = vmatprep.subr.mxu0 0.0
    %1555 = vmatpush1.msra.mxu0 0.0
    %1556 = vmatprep.subr.mxu0 0.0
    %1557 = vmatpush1.msra.mxu0 0.0
    %1558 = vmatprep.subr.mxu0 0.0
    %1559 = vmatpush1.msra.mxu0 0.0
    %1560 = vmatprep.subr.mxu0 0.0
    %1561 = vmatpush1.msra.mxu0 0.0
    %1562 = vmatprep.subr.mxu0 0.0
    %1563 = vmatpush1.msra.mxu0 0.0
    %1564 = vmatprep.subr.mxu0 0.0
    %1565 = vmatpush1.msra.mxu0 0.0
    %1566 = vmatprep.subr.mxu0 0.0
    %1567 = vmatpush1.msra.mxu0 0.0
    %1568 = vmatprep.subr.mxu0 0.0
    %1569 = vmatpush1.msra.mxu0 0.0
    %1570 = vmatprep.subr.mxu0 0.0
    %1571 = vmatpush1.msra.mxu0 0.0
    %1572 = vmatprep.subr.mxu0 0.0
    %1573 = vmatpush1.msra.mxu0 0.0
    %1574 = vmatprep.subr.mxu0 0.0
    %1575 = vmatpush1.msra.mxu0 0.0
    %1576 = vmatprep.subr.mxu0 0.0
    %1577 = vmatpush1.msra.mxu0 0.0
    %1578 = vmatprep.subr.mxu0 0.0
    %1579 = vmatpush1.msra.mxu0 0.0
    %1580 = vmatprep.subr.mxu0 0.0
    %1581 = vmatpush1.msra.mxu0 0.0
    %1582 = vmatprep.subr.mxu0 0.0
    %1583 = vmatpush1.msra.mxu0 0.0
    %1584 = vmatprep.subr.mxu0 0.0
    %1585 = vmatpush1.msra.mxu0 0.0
    %1586 = vmatprep.subr.mxu0 0.0
    %1587 = vmatpush1.msra.mxu0 0.0
    %1588 = vmatprep.subr.mxu0 0.0
    %1589 = vmatpush1.msra.mxu0 0.0
    %1590 = vmatprep.subr.mxu0 0.0
    %1591 = vmatpush1.msra.mxu0 0.0
    %1592 = vmatprep.subr.mxu0 0.0
    %1593 = vmatpush1.msra.mxu0 0.0
    %1594 = vmatprep.subr.mxu0 0.0
    %1595 = vmatpush1.msra.mxu0 0.0
    %1596 = vmatprep.subr.mxu0 0.0
    %1597 = vmatpush1.msra.mxu0 0.0
    %1598 = vmatprep.subr.mxu0 0.0
    %1599 = vmatpush1.msra.mxu0 0.0
    %1600 = vmatprep.subr.mxu0 0.0
    %1601 = vmatpush1.msra.mxu0 0.0
    %1602 = vmatprep.subr.mxu0 0.0
    %1603 = vmatpush1.msra.mxu0 0.0
    %1604 = vmatprep.subr.mxu0 0.0
    %1605 = vmatpush1.msra.mxu0 0.0
    %1606 = vmatprep.subr.mxu0 0.0
    %1607 = vmatpush1.msra.mxu0 0.0
    %1608 = vmatprep.mubr.f32.mxu0 0.0
    %1609 = vmatmul.mubr.f32.gmra.mrb[0].mxu0 %v1539
    %v1610 = vpop.f32.mrb[0].mxu0
    %v1611 = vadd.f32 %v1537, %v1610
    %v1612 = vpop.f32.mrb[0].mxu0
    %1613 = vmatprep.mubr.f32.mxu0 0.0
    %1614 = vmatmul.mubr.f32.gmra.mrb[0].mxu0 %v1542
    %v1615 = vpop.f32.mrb[0].mxu0
    %v1616 = vadd.f32 %v1537, %v1615
    %v1617 = vpop.f32.mrb[0].mxu0
    %1618 = vdwg.mxu0
    %v1619 = vmul.f32 %v1611, 0.5
    %v1620 = vmul.f32 %v1616, 0.5
    %v1621 = vmul.f32 %v1611, 0.70710677
    %v1622 = vmul.f32 %v1616, 0.70710677
    %v1623 = verf.f32.pop %v1621
    %v1624 = verf.f32.pop %v1622
    %v1625 = vadd.f32 %v1623, 1.0
    %v1626 = vadd.f32 %v1624, 1.0
    %v1627 = vmul.f32 %v1619, %v1625
    %v1628 = vmul.f32 %v1620, %v1626
    %v1629 = vld [vmem:[%s4] sm:$0xff]
    %v1630 = vld [vmem:[%s4 + $0x8] sm:$0xff]
    %v1631 = vld [vmem:[%s4 + $0x10] sm:$0xff]
    %v1632 = vld [vmem:[%s4 + $0x18] sm:$0xff]
    %v1633 = vld [vmem:[%s4 + $0x20] sm:$0xff]
    %v1634 = vld [vmem:[%s4 + $0x28] sm:$0xff]
    %v1635 = vld [vmem:[%s4 + $0x30] sm:$0xff]
    %v1636 = vld [vmem:[%s4 + $0x38] sm:$0xff]
    %v1637 = vlaneseq
    %v1638 = vshrl.u32 %v1637, 7
    %v1639 = vsub.s32 6, %v1638
    %v1640 = vrot.slane %v23, %v1639
    %vm1641 = vcmask 523264
    %v1643 = vsel %vm1641, %v1627, 0
    %v1646 = vsel %vm1641, %v1628, 0
    %1648 = vmatprep.subr.mxu0 0.0
    %1649 = vmatpush1.msra.mxu0 %v1629
    %1650 = vmatprep.subr.mxu0 0.0
    %1651 = vmatpush1.msra.mxu0 %v1630
    %1652 = vmatprep.subr.mxu0 0.0
    %1653 = vmatpush1.msra.mxu0 %v1631
    %1654 = vmatprep.subr.mxu0 0.0
    %1655 = vmatpush1.msra.mxu0 %v1632
    %1656 = vmatprep.subr.mxu0 0.0
    %1657 = vmatpush1.msra.mxu0 %v1633
    %1658 = vmatprep.subr.mxu0 0.0
    %1659 = vmatpush1.msra.mxu0 %v1634
    %1660 = vmatprep.subr.mxu0 0.0
    %1661 = vmatpush1.msra.mxu0 %v1635
    %1662 = vmatprep.subr.mxu0 0.0
    %1663 = vmatpush1.msra.mxu0 %v1636
    %1664 = vmatprep.subr.mxu0 0.0
    %1665 = vmatpush1.msra.mxu0 0.0
    %1666 = vmatprep.subr.mxu0 0.0
    %1667 = vmatpush1.msra.mxu0 0.0
    %1668 = vmatprep.subr.mxu0 0.0
    %1669 = vmatpush1.msra.mxu0 0.0
    %1670 = vmatprep.subr.mxu0 0.0
    %1671 = vmatpush1.msra.mxu0 0.0
    %1672 = vmatprep.subr.mxu0 0.0
    %1673 = vmatpush1.msra.mxu0 0.0
    %1674 = vmatprep.subr.mxu0 0.0
    %1675 = vmatpush1.msra.mxu0 0.0
    %1676 = vmatprep.subr.mxu0 0.0
    %1677 = vmatpush1.msra.mxu0 0.0
    %1678 = vmatprep.subr.mxu0 0.0
    %1679 = vmatpush1.msra.mxu0 0.0
    %1680 = vmatprep.subr.mxu0 0.0
    %1681 = vmatpush1.msra.mxu0 0.0
    %1682 = vmatprep.subr.mxu0 0.0
    %1683 = vmatpush1.msra.mxu0 0.0
    %1684 = vmatprep.subr.mxu0 0.0
    %1685 = vmatpush1.msra.mxu0 0.0
    %1686 = vmatprep.subr.mxu0 0.0
    %1687 = vmatpush1.msra.mxu0 0.0
    %1688 = vmatprep.subr.mxu0 0.0
    %1689 = vmatpush1.msra.mxu0 0.0
    %1690 = vmatprep.subr.mxu0 0.0
    %1691 = vmatpush1.msra.mxu0 0.0
    %1692 = vmatprep.subr.mxu0 0.0
    %1693 = vmatpush1.msra.mxu0 0.0
    %1694 = vmatprep.subr.mxu0 0.0
    %1695 = vmatpush1.msra.mxu0 0.0
    %1696 = vmatprep.subr.mxu0 0.0
    %1697 = vmatpush1.msra.mxu0 0.0
    %1698 = vmatprep.subr.mxu0 0.0
    %1699 = vmatpush1.msra.mxu0 0.0
    %1700 = vmatprep.subr.mxu0 0.0
    %1701 = vmatpush1.msra.mxu0 0.0
    %1702 = vmatprep.subr.mxu0 0.0
    %1703 = vmatpush1.msra.mxu0 0.0
    %1704 = vmatprep.subr.mxu0 0.0
    %1705 = vmatpush1.msra.mxu0 0.0
    %1706 = vmatprep.subr.mxu0 0.0
    %1707 = vmatpush1.msra.mxu0 0.0
    %1708 = vmatprep.subr.mxu0 0.0
    %1709 = vmatpush1.msra.mxu0 0.0
    %1710 = vmatprep.subr.mxu0 0.0
    %1711 = vmatpush1.msra.mxu0 0.0
    %1712 = vmatprep.mubr.f32.mxu0 0.0
    %1713 = vmatmul.mubr.f32.gmra.mrb[0].mxu0 %v1643
    %v1714 = vpop.f32.mrb[0].mxu0
    %v1715 = vadd.f32 %v1640, %v1714
    %v1716 = vpop.f32.mrb[0].mxu0
    %1717 = vmatprep.mubr.f32.mxu0 0.0
    %1718 = vmatmul.mubr.f32.gmra.mrb[0].mxu0 %v1646
    %v1719 = vpop.f32.mrb[0].mxu0
    %v1720 = vadd.f32 %v1640, %v1719
    %v1721 = vpop.f32.mrb[0].mxu0
    %1722 = vdwg.mxu0
    %v1723 = vadd.f32 %v1490, %v1715
    %v1724 = vadd.f32 %v1491, %v1720
    %1725 = vst.msk [vmem:[#allocation2] sm:$0xff] %vm24, %v1723
    %1726 = vst.msk [vmem:[#allocation2 + $0x8] sm:$0xff] %vm24, %v1724
    // Predicated region
    $region22: #{transformer_encoder_block.1} parent=1 // pred_check
      _
    $region23: #{transformer_encoder_block.1} parent=1 // pred_check_branch
      %1728 = sbr.rel (0) target = $region25
    $region24: #{transformer_encoder_block.1} parent=1 // pred_region
      %s1730 = ssub.s32 256, 256
      %1731 = vsyncadd [#allocation3], %s1730
      %s1732 = sshll.u32 [#allocation2], 4
      %s1733 = int_to_ptr.vmem [resolvable:$true] %s1732
      %1738 = dma.vmem_to_hbm [thread:$0]  %s1733, 256, %s5, [#allocation3], 128, 128, 8
    $region25: #{transformer_encoder_block.1} parent=1 // pred_fallthru
      _
    // Predicated region
    $region26: #{transformer_encoder_block.1} parent=1 // pred_check
      _
    $region27: #{transformer_encoder_block.1} parent=1 // pred_check_branch
      %1740 = sbr.rel (0) target = $region29
    $region28: #{transformer_encoder_block.1} parent=1 // pred_region
      %1741 = dma.done [#allocation3], 256
    $region29: #{transformer_encoder_block.1} parent=1 // pred_fallthru
      _
    %1742 = vsyncpa [#allocation3], 1

</llo_original>
